<compile_context>
chip_gen: v5e
topology: v5e:2x2
jax: 0.10.0
libtpu: 0.0.40
codegen_flags: <defaults>
</compile_context>

<pallas_src>
import math
from functools import partial

import jax
import jax.numpy as jnp
import numpy as np
from jax.experimental import pallas as pl
from jax.experimental.pallas import tpu as pltpu


def transformer_block_kernel(num_heads,
                             x_ref,
                             wqkv_ref, bqkv_ref,
                             wo_ref, bo_ref,
                             w1_ref, b1_ref, w2_ref, b2_ref,
                             ln1_s_ref, ln1_b_ref, ln2_s_ref, ln2_b_ref,
                             out_ref):
    eps = 1e-5
    bf16 = jnp.bfloat16

    xb = x_ref[...]                         # (bt, T, D) f32
    bt, T, D = xb.shape
    H = num_heads
    hd = D // H
    M = bt * T
    x2 = xb.reshape(M, D)                   # flatten batch*tokens -> MXU rows

    def layernorm(v, s, b):
        mean = jnp.mean(v, axis=-1, keepdims=True)
        var = jnp.mean((v - mean) ** 2, axis=-1, keepdims=True)    # unbiased=False
        return s * ((v - mean) * jax.lax.rsqrt(var + eps)) + b

    def gelu(v):
        c = math.sqrt(2.0 / math.pi)
        return 0.5 * v * (1.0 + jnp.tanh(c * (v + 0.044715 * v * v * v)))

    # ---------------- attention sublayer ----------------
    h = layernorm(x2, ln1_s_ref[...], ln1_b_ref[...])              # (M, D) f32

    # fused QKV projection: one (M, D) x (D, 3D) bf16 matmul, f32 accumulation
    qkv = jnp.dot(h.astype(bf16), wqkv_ref[...],
                  preferred_element_type=jnp.float32) + bqkv_ref[...]   # (M, 3D) f32

    scale = 1.0 / math.sqrt(hd)                                    # fold scale into q
    q = (qkv[:, 0:D] * scale).reshape(bt, T, H, hd)
    k = qkv[:, D:2 * D].reshape(bt, T, H, hd)
    v = qkv[:, 2 * D:3 * D].reshape(bt, T, H, hd)

    # (bt, T, H, hd) -> (bt*H, T, hd): heads become a batch dim for batched matmuls
    qh = q.transpose(0, 2, 1, 3).reshape(bt * H, T, hd).astype(bf16)
    kh = k.transpose(0, 2, 1, 3).reshape(bt * H, T, hd).astype(bf16)
    vh = v.transpose(0, 2, 1, 3).reshape(bt * H, T, hd).astype(bf16)

    scores = jnp.einsum('bqd,bkd->bqk', qh, kh,
                        preferred_element_type=jnp.float32)        # (bt*H, T, T) f32

    row = jax.lax.broadcasted_iota(jnp.int32, (T, T), 0)
    col = jax.lax.broadcasted_iota(jnp.int32, (T, T), 1)
    neg = jnp.float32(-1e30)                                       # finite mask fill
    scores = jnp.where((col > row)[None, :, :], neg, scores)

    m = jnp.max(scores, axis=-1, keepdims=True)
    p = jnp.exp(scores - m)
    denom = jnp.sum(p, axis=-1, keepdims=True)
    p = p * pl.reciprocal(denom, approx=True)                      # EUP reciprocal

    ctx = jnp.einsum('bqk,bkd->bqd', p.astype(bf16), vh,
                     preferred_element_type=jnp.float32)           # (bt*H, T, hd)
    ctx = ctx.reshape(bt, H, T, hd).transpose(0, 2, 1, 3).reshape(M, D)

    attn = jnp.dot(ctx.astype(bf16), wo_ref[...],
                   preferred_element_type=jnp.float32) + bo_ref[...]
    # TODO(synk): dropout (attention weights + drop_shortcut) is identity in eval mode.
    x1 = x2 + attn                                                  # residual in f32

    # ---------------- feed-forward sublayer ----------------
    h = layernorm(x1, ln2_s_ref[...], ln2_b_ref[...])
    h1 = jnp.dot(h.astype(bf16), w1_ref[...],
                 preferred_element_type=jnp.float32) + b1_ref[...]
    h1 = gelu(h1)                                                   # f32 GELU
    h2 = jnp.dot(h1.astype(bf16), w2_ref[...],
                 preferred_element_type=jnp.float32) + b2_ref[...]

    out_ref[...] = (x1 + h2).reshape(bt, T, D).astype(out_ref.dtype)


def transformer_forward(x, params, num_heads, *, batch_tile=None):
    (wq, bq, wk, bk, wv, bv, wo, bo, w1, b1, w2, b2, s1, sh1, s2, sh2) = params
    B, T, D = x.shape
    H4 = 4 * D

    # Host-side fusion + bf16 cast of MXU weight operands (biases / LN params stay f32).
    wqkv = jnp.concatenate([wq, wk, wv], axis=1).astype(jnp.bfloat16)   # (D, 3D)
    bqkv = jnp.concatenate([bq, bk, bv], axis=1).astype(jnp.float32)    # (1, 3D)
    kparams = (wqkv, bqkv,
               wo.astype(jnp.bfloat16), bo,
               w1.astype(jnp.bfloat16), b1,
               w2.astype(jnp.bfloat16), b2,
               s1, sh1, s2, sh2)

    # Batch tile: pack enough batch elements per grid step to feed the MXU ~128 rows.
    # (On v7x one may prefer batch_tile=B//2 so both TensorCores get a grid step.)
    if batch_tile is None:
        target = max(1, -(-128 // T))
        batch_tile = 1
        for cand in range(min(B, target), 0, -1):
            if B % cand == 0:
                batch_tile = cand
                break
    bt = batch_tile
    assert B % bt == 0
    grid = (B // bt,)

    # Explicit VMEM budget: 2x (double-buffered) bf16 weights + activation scratch + io blocks.
    wbytes = 2 * (3 * D * D + D * D + D * H4 + H4 * D)
    abytes = 4 * bt * T * (3 * D + 4 * D + 2 * D) + 4 * bt * num_heads * T * T * 2
    iobytes = 4 * bt * T * D * 4
    vmem_limit = int(min(2 * wbytes + 2 * abytes + iobytes + (8 << 20), 64 << 20))

    def full(shape):
        return pl.BlockSpec(shape, lambda b, _n=len(shape): (0,) * _n)

    in_specs = [
        pl.BlockSpec((bt, T, D), lambda b: (b, 0, 0)),   # x block (bt batch elems per step)
        full((D, 3 * D)), full((1, 3 * D)),              # fused QKV weight / bias
        full((D, D)),     full((1, D)),                  # out projection
        full((D, H4)),    full((1, H4)),                 # FF layer 1
        full((H4, D)),    full((1, D)),                  # FF layer 2
        full((1, D)),     full((1, D)),                  # norm1 scale / shift
        full((1, D)),     full((1, D)),                  # norm2 scale / shift
    ]

    kernel = partial(transformer_block_kernel, num_heads)
    return pl.pallas_call(
        kernel,
        out_shape=jax.ShapeDtypeStruct((B, T, D), x.dtype),
        grid=grid,
        in_specs=in_specs,
        out_specs=pl.BlockSpec((bt, T, D), lambda b: (b, 0, 0)),
        compiler_params=pltpu.CompilerParams(
            dimension_semantics=("parallel",),
            vmem_limit_bytes=vmem_limit,
        ),
    )(x, *kparams)


def reference_forward(x, params, num_heads):
    (wq, bq, wk, bk, wv, bv, wo, bo, w1, b1, w2, b2, s1, sh1, s2, sh2) = params

    def ln(v, s, b):
        m = v.mean(-1, keepdims=True)
        var = ((v - m) ** 2).mean(-1, keepdims=True)
        return s * (v - m) / jnp.sqrt(var + 1e-5) + b

    def gelu(v):
        return 0.5 * v * (1 + jnp.tanh(jnp.sqrt(2 / jnp.pi) * (v + 0.044715 * v ** 3)))

    B, T, D = x.shape
    hd = D // num_heads
    sc = x
    h = ln(x, s1, sh1)
    q = (h @ wq + bq).reshape(B, T, num_heads, hd).transpose(0, 2, 1, 3)
    k = (h @ wk + bk).reshape(B, T, num_heads, hd).transpose(0, 2, 1, 3)
    v = (h @ wv + bv).reshape(B, T, num_heads, hd).transpose(0, 2, 1, 3)
    scores = q @ jnp.swapaxes(k, -1, -2)
    mask = jnp.triu(jnp.ones((T, T), bool), 1)
    scores = jnp.where(mask, -jnp.inf, scores)
    w = jax.nn.softmax(scores / hd ** 0.5, axis=-1)
    ctx = (w @ v).transpose(0, 2, 1, 3).reshape(B, T, D)
    x1 = ctx @ wo + bo + sc
    sc = x1
    h = ln(x1, s2, sh2)
    h = gelu(h @ w1 + b1) @ w2 + b2
    return h + sc


if __name__ == "__main__":
    B, T, D, NUM_HEADS = 2, 8, 32, 4          # batch, context_length, embed_dim, num_heads
    key = jax.random.PRNGKey(0)
    keys = jax.random.split(key, 8)

    def lin(k, din, dout):
        kw, kb = jax.random.split(k)
        w = jax.random.normal(kw, (din, dout), jnp.float32) * 0.05
        b = jax.random.normal(kb, (1, dout), jnp.float32) * 0.05
        return w, b

    wq, bq = lin(keys[0], D, D)
    wk, bk = lin(keys[1], D, D)
    wv, bv = lin(keys[2], D, D)
    wo, bo = lin(keys[3], D, D)
    w1, b1 = lin(keys[4], D, 4 * D)
    w2, b2 = lin(keys[5], 4 * D, D)
    ln1_s = jnp.ones((1, D), jnp.float32)
    ln1_b = jnp.zeros((1, D), jnp.float32)
    ln2_s = jnp.ones((1, D), jnp.float32)
    ln2_b = jnp.zeros((1, D), jnp.float32)
    params = (wq, bq, wk, bk, wv, bv, wo, bo, w1, b1, w2, b2,
              ln1_s, ln1_b, ln2_s, ln2_b)

    x = jax.random.normal(keys[6], (B, T, D), jnp.float32)

    out = transformer_forward(x, params, NUM_HEADS)
    out = jax.block_until_ready(out)

    ref = reference_forward(x, params, NUM_HEADS)   # faithful f32 reference
    assert out.shape == (B, T, D)
    # Tolerance accounts for bf16 MXU operands + approx EUP reciprocal in the kernel.
    np.testing.assert_allclose(np.asarray(out), np.asarray(ref), rtol=2e-2, atol=2e-2)
    print("KERNEL_OK")
</pallas_src>

<mosaic_0001>
module attributes {stable_mosaic.version = 11 : i64} {
  func.func @transformer_block_kernel(%arg0: i32, %arg1: memref<2x8x32xf32, #tpu.memory_space<vmem>>, %arg2: memref<32x96xbf16, #tpu.memory_space<vmem>>, %arg3: memref<1x96xf32, #tpu.memory_space<vmem>>, %arg4: memref<32x32xbf16, #tpu.memory_space<vmem>>, %arg5: memref<1x32xf32, #tpu.memory_space<vmem>>, %arg6: memref<32x128xbf16, #tpu.memory_space<vmem>>, %arg7: memref<1x128xf32, #tpu.memory_space<vmem>>, %arg8: memref<128x32xbf16, #tpu.memory_space<vmem>>, %arg9: memref<1x32xf32, #tpu.memory_space<vmem>>, %arg10: memref<1x32xf32, #tpu.memory_space<vmem>>, %arg11: memref<1x32xf32, #tpu.memory_space<vmem>>, %arg12: memref<1x32xf32, #tpu.memory_space<vmem>>, %arg13: memref<1x32xf32, #tpu.memory_space<vmem>>, %arg14: memref<2x8x32xf32, #tpu.memory_space<vmem>>) attributes {dimension_semantics = [#tpu.dimension_semantics<parallel>], iteration_bounds = array<i64: 1>, scalar_prefetch = 0 : i64, scratch_operands = 0 : i64, tpu.core_type = #tpu.core_type<tc>, window_params = [{transform_indices = @transform_0, window_bounds = array<i64: 2, 8, 32>}, {pipeline_mode = #tpu.pipeline_mode<synchronous>, transform_indices = @transform_1, window_bounds = array<i64: 32, 96>}, {pipeline_mode = #tpu.pipeline_mode<synchronous>, transform_indices = @transform_2, window_bounds = array<i64: 1, 96>}, {pipeline_mode = #tpu.pipeline_mode<synchronous>, transform_indices = @transform_3, window_bounds = array<i64: 32, 32>}, {pipeline_mode = #tpu.pipeline_mode<synchronous>, transform_indices = @transform_4, window_bounds = array<i64: 1, 32>}, {pipeline_mode = #tpu.pipeline_mode<synchronous>, transform_indices = @transform_5, window_bounds = array<i64: 32, 128>}, {pipeline_mode = #tpu.pipeline_mode<synchronous>, transform_indices = @transform_6, window_bounds = array<i64: 1, 128>}, {pipeline_mode = #tpu.pipeline_mode<synchronous>, transform_indices = @transform_7, window_bounds = array<i64: 128, 32>}, {pipeline_mode = #tpu.pipeline_mode<synchronous>, transform_indices = @transform_8, window_bounds = array<i64: 1, 32>}, {pipeline_mode = #tpu.pipeline_mode<synchronous>, transform_indices = @transform_9, window_bounds = array<i64: 1, 32>}, {pipeline_mode = #tpu.pipeline_mode<synchronous>, transform_indices = @transform_10, window_bounds = array<i64: 1, 32>}, {pipeline_mode = #tpu.pipeline_mode<synchronous>, transform_indices = @transform_11, window_bounds = array<i64: 1, 32>}, {pipeline_mode = #tpu.pipeline_mode<synchronous>, transform_indices = @transform_12, window_bounds = array<i64: 1, 32>}, {transform_indices = @transform_13, window_bounds = array<i64: 2, 8, 32>}]} {
    %c0 = arith.constant 0 : index
    %c0_0 = arith.constant 0 : index
    %c0_1 = arith.constant 0 : index
    %0 = vector.load %arg1[%c0, %c0_0, %c0_1] : memref<2x8x32xf32, #tpu.memory_space<vmem>>, vector<2x8x32xf32>
    %1 = vector.shape_cast %0 : vector<2x8x32xf32> to vector<16x32xf32>
    %c0_2 = arith.constant 0 : index
    %c0_3 = arith.constant 0 : index
    %2 = vector.load %arg10[%c0_2, %c0_3] : memref<1x32xf32, #tpu.memory_space<vmem>>, vector<1x32xf32>
    %c0_4 = arith.constant 0 : index
    %c0_5 = arith.constant 0 : index
    %3 = vector.load %arg11[%c0_4, %c0_5] : memref<1x32xf32, #tpu.memory_space<vmem>>, vector<1x32xf32>
    %cst = arith.constant dense<0.000000e+00> : vector<16xf32>
    %4 = vector.multi_reduction <add>, %1, %cst [1] : vector<16x32xf32> to vector<16xf32>
    %5 = vector.shape_cast %4 : vector<16xf32> to vector<16x1xf32>
    %cst_6 = arith.constant 3.200000e+01 : f32
    %6 = vector.broadcast %cst_6 : f32 to vector<16x1xf32>
    %7 = arith.divf %5, %6 : vector<16x1xf32>
    %8 = vector.broadcast %7 : vector<16x1xf32> to vector<16x32xf32>
    %9 = arith.subf %1, %8 : vector<16x32xf32>
    %10 = arith.mulf %9, %9 : vector<16x32xf32>
    %cst_7 = arith.constant dense<0.000000e+00> : vector<16xf32>
    %11 = vector.multi_reduction <add>, %10, %cst_7 [1] : vector<16x32xf32> to vector<16xf32>
    %12 = vector.shape_cast %11 : vector<16xf32> to vector<16x1xf32>
    %cst_8 = arith.constant 3.200000e+01 : f32
    %13 = vector.broadcast %cst_8 : f32 to vector<16x1xf32>
    %14 = arith.divf %12, %13 : vector<16x1xf32>
    %15 = vector.broadcast %7 : vector<16x1xf32> to vector<16x32xf32>
    %16 = arith.subf %1, %15 : vector<16x32xf32>
    %cst_9 = arith.constant 9.99999974E-6 : f32
    %17 = vector.broadcast %cst_9 : f32 to vector<16x1xf32>
    %18 = arith.addf %14, %17 : vector<16x1xf32>
    %19 = math.rsqrt %18 : vector<16x1xf32>
    %20 = vector.broadcast %19 : vector<16x1xf32> to vector<16x32xf32>
    %21 = arith.mulf %16, %20 : vector<16x32xf32>
    %22 = vector.broadcast %2 : vector<1x32xf32> to vector<16x32xf32>
    %23 = arith.mulf %22, %21 : vector<16x32xf32>
    %24 = vector.broadcast %3 : vector<1x32xf32> to vector<16x32xf32>
    %25 = arith.addf %23, %24 : vector<16x32xf32>
    %26 = arith.truncf %25 : vector<16x32xf32> to vector<16x32xbf16>
    %c0_10 = arith.constant 0 : index
    %c0_11 = arith.constant 0 : index
    %27 = vector.load %arg2[%c0_10, %c0_11] : memref<32x96xbf16, #tpu.memory_space<vmem>>, vector<32x96xbf16>
    %cst_12 = arith.constant dense<0.000000e+00> : vector<16x96xf32>
    %28 = tpu.matmul %26, %27, %cst_12 {dimension_numbers = #tpu.dot_dimension_numbers<[1], [0], [0], [1], [0, 0, 1, 1], [], []>} : vector<16x32xbf16>, vector<32x96xbf16>, vector<16x96xf32> -> vector<16x96xf32>
    %c0_13 = arith.constant 0 : index
    %c0_14 = arith.constant 0 : index
    %29 = vector.load %arg3[%c0_13, %c0_14] : memref<1x96xf32, #tpu.memory_space<vmem>>, vector<1x96xf32>
    %30 = vector.broadcast %29 : vector<1x96xf32> to vector<16x96xf32>
    %31 = arith.addf %28, %30 : vector<16x96xf32>
    %32 = vector.extract_strided_slice %31 {offsets = [0, 0], sizes = [16, 32], strides = [1, 1]} : vector<16x96xf32> to vector<16x32xf32>
    %cst_15 = arith.constant 0.353553385 : f32
    %33 = vector.broadcast %cst_15 : f32 to vector<16x32xf32>
    %34 = arith.mulf %32, %33 : vector<16x32xf32>
    %35 = vector.shape_cast %34 : vector<16x32xf32> to vector<2x8x4x8xf32>
    %36 = vector.extract_strided_slice %31 {offsets = [0, 32], sizes = [16, 32], strides = [1, 1]} : vector<16x96xf32> to vector<16x32xf32>
    %37 = vector.shape_cast %36 : vector<16x32xf32> to vector<2x8x4x8xf32>
    %38 = vector.extract_strided_slice %31 {offsets = [0, 64], sizes = [16, 32], strides = [1, 1]} : vector<16x96xf32> to vector<16x32xf32>
    %39 = vector.shape_cast %38 : vector<16x32xf32> to vector<2x8x4x8xf32>
    %40 = tpu.transpose %35, [0, 2, 1, 3] : vector<2x8x4x8xf32> -> vector<2x4x8x8xf32>
    %41 = vector.shape_cast %40 : vector<2x4x8x8xf32> to vector<8x8x8xf32>
    %42 = arith.truncf %41 : vector<8x8x8xf32> to vector<8x8x8xbf16>
    %43 = tpu.transpose %37, [0, 2, 1, 3] : vector<2x8x4x8xf32> -> vector<2x4x8x8xf32>
    %44 = vector.shape_cast %43 : vector<2x4x8x8xf32> to vector<8x8x8xf32>
    %45 = arith.truncf %44 : vector<8x8x8xf32> to vector<8x8x8xbf16>
    %46 = tpu.transpose %39, [0, 2, 1, 3] : vector<2x8x4x8xf32> -> vector<2x4x8x8xf32>
    %47 = vector.shape_cast %46 : vector<2x4x8x8xf32> to vector<8x8x8xf32>
    %48 = arith.truncf %47 : vector<8x8x8xf32> to vector<8x8x8xbf16>
    "tpu.trace_start"() <{level = 10 : i32, message = "bqd,bkd->bqk"}> : () -> ()
    %cst_16 = arith.constant dense<0.000000e+00> : vector<8x8x8xf32>
    %49 = tpu.matmul %42, %45, %cst_16 {dimension_numbers = #tpu.dot_dimension_numbers<[2], [2], [1], [1], [0, 0, 0, 1, 1, 1], [0], [0]>} : vector<8x8x8xbf16>, vector<8x8x8xbf16>, vector<8x8x8xf32> -> vector<8x8x8xf32>
    "tpu.trace_stop"() : () -> ()
    %50 = tpu.iota {dimensions = array<i32: 0>} : vector<8x8xi32>
    %51 = tpu.iota {dimensions = array<i32: 1>} : vector<8x8xi32>
    %52 = arith.cmpi sgt, %51, %50 : vector<8x8xi32>
    %53 = vector.shape_cast %52 : vector<8x8xi1> to vector<1x8x8xi1>
    %cst_17 = arith.constant -1.000000e+30 : f32
    %54 = vector.shape_cast %53 : vector<1x8x8xi1> to vector<1x8x8xi1>
    %55 = vector.broadcast %54 : vector<1x8x8xi1> to vector<8x8x8xi1>
    %56 = vector.broadcast %cst_17 : f32 to vector<8x8x8xf32>
    %57 = arith.select %55, %56, %49 : vector<8x8x8xi1>, vector<8x8x8xf32>
    %cst_18 = arith.constant dense<0xFF800000> : vector<8x8xf32>
    %58 = vector.multi_reduction <maximumf>, %57, %cst_18 [2] : vector<8x8x8xf32> to vector<8x8xf32>
    %59 = vector.shape_cast %58 : vector<8x8xf32> to vector<8x8x1xf32>
    %60 = vector.broadcast %59 : vector<8x8x1xf32> to vector<8x8x8xf32>
    %61 = arith.subf %57, %60 : vector<8x8x8xf32>
    %62 = math.exp %61 : vector<8x8x8xf32>
    %cst_19 = arith.constant dense<0.000000e+00> : vector<8x8xf32>
    %63 = vector.multi_reduction <add>, %62, %cst_19 [2] : vector<8x8x8xf32> to vector<8x8xf32>
    %64 = vector.shape_cast %63 : vector<8x8xf32> to vector<8x8x1xf32>
    %65 = tpu.reciprocal %64 {approx = true} : vector<8x8x1xf32> -> vector<8x8x1xf32>
    %66 = vector.broadcast %65 : vector<8x8x1xf32> to vector<8x8x8xf32>
    %67 = arith.mulf %62, %66 : vector<8x8x8xf32>
    %68 = arith.truncf %67 : vector<8x8x8xf32> to vector<8x8x8xbf16>
    "tpu.trace_start"() <{level = 10 : i32, message = "bqk,bkd->bqd"}> : () -> ()
    %cst_20 = arith.constant dense<0.000000e+00> : vector<8x8x8xf32>
    %69 = tpu.matmul %68, %48, %cst_20 {dimension_numbers = #tpu.dot_dimension_numbers<[2], [1], [1], [2], [0, 0, 0, 1, 1, 2], [0], [0]>} : vector<8x8x8xbf16>, vector<8x8x8xbf16>, vector<8x8x8xf32> -> vector<8x8x8xf32>
    "tpu.trace_stop"() : () -> ()
    %70 = vector.shape_cast %69 : vector<8x8x8xf32> to vector<2x4x8x8xf32>
    %71 = tpu.transpose %70, [0, 2, 1, 3] : vector<2x4x8x8xf32> -> vector<2x8x4x8xf32>
    %72 = vector.shape_cast %71 : vector<2x8x4x8xf32> to vector<16x32xf32>
    %73 = arith.truncf %72 : vector<16x32xf32> to vector<16x32xbf16>
    %c0_21 = arith.constant 0 : index
    %c0_22 = arith.constant 0 : index
    %74 = vector.load %arg4[%c0_21, %c0_22] : memref<32x32xbf16, #tpu.memory_space<vmem>>, vector<32x32xbf16>
    %cst_23 = arith.constant dense<0.000000e+00> : vector<16x32xf32>
    %75 = tpu.matmul %73, %74, %cst_23 {dimension_numbers = #tpu.dot_dimension_numbers<[1], [0], [0], [1], [0, 0, 1, 1], [], []>} : vector<16x32xbf16>, vector<32x32xbf16>, vector<16x32xf32> -> vector<16x32xf32>
    %c0_24 = arith.constant 0 : index
    %c0_25 = arith.constant 0 : index
    %76 = vector.load %arg5[%c0_24, %c0_25] : memref<1x32xf32, #tpu.memory_space<vmem>>, vector<1x32xf32>
    %77 = vector.broadcast %76 : vector<1x32xf32> to vector<16x32xf32>
    %78 = arith.addf %75, %77 : vector<16x32xf32>
    %79 = arith.addf %1, %78 : vector<16x32xf32>
    %c0_26 = arith.constant 0 : index
    %c0_27 = arith.constant 0 : index
    %80 = vector.load %arg12[%c0_26, %c0_27] : memref<1x32xf32, #tpu.memory_space<vmem>>, vector<1x32xf32>
    %c0_28 = arith.constant 0 : index
    %c0_29 = arith.constant 0 : index
    %81 = vector.load %arg13[%c0_28, %c0_29] : memref<1x32xf32, #tpu.memory_space<vmem>>, vector<1x32xf32>
    %cst_30 = arith.constant dense<0.000000e+00> : vector<16xf32>
    %82 = vector.multi_reduction <add>, %79, %cst_30 [1] : vector<16x32xf32> to vector<16xf32>
    %83 = vector.shape_cast %82 : vector<16xf32> to vector<16x1xf32>
    %cst_31 = arith.constant 3.200000e+01 : f32
    %84 = vector.broadcast %cst_31 : f32 to vector<16x1xf32>
    %85 = arith.divf %83, %84 : vector<16x1xf32>
    %86 = vector.broadcast %85 : vector<16x1xf32> to vector<16x32xf32>
    %87 = arith.subf %79, %86 : vector<16x32xf32>
    %88 = arith.mulf %87, %87 : vector<16x32xf32>
    %cst_32 = arith.constant dense<0.000000e+00> : vector<16xf32>
    %89 = vector.multi_reduction <add>, %88, %cst_32 [1] : vector<16x32xf32> to vector<16xf32>
    %90 = vector.shape_cast %89 : vector<16xf32> to vector<16x1xf32>
    %cst_33 = arith.constant 3.200000e+01 : f32
    %91 = vector.broadcast %cst_33 : f32 to vector<16x1xf32>
    %92 = arith.divf %90, %91 : vector<16x1xf32>
    %93 = vector.broadcast %85 : vector<16x1xf32> to vector<16x32xf32>
    %94 = arith.subf %79, %93 : vector<16x32xf32>
    %cst_34 = arith.constant 9.99999974E-6 : f32
    %95 = vector.broadcast %cst_34 : f32 to vector<16x1xf32>
    %96 = arith.addf %92, %95 : vector<16x1xf32>
    %97 = math.rsqrt %96 : vector<16x1xf32>
    %98 = vector.broadcast %97 : vector<16x1xf32> to vector<16x32xf32>
    %99 = arith.mulf %94, %98 : vector<16x32xf32>
    %100 = vector.broadcast %80 : vector<1x32xf32> to vector<16x32xf32>
    %101 = arith.mulf %100, %99 : vector<16x32xf32>
    %102 = vector.broadcast %81 : vector<1x32xf32> to vector<16x32xf32>
    %103 = arith.addf %101, %102 : vector<16x32xf32>
    %104 = arith.truncf %103 : vector<16x32xf32> to vector<16x32xbf16>
    %c0_35 = arith.constant 0 : index
    %c0_36 = arith.constant 0 : index
    %105 = vector.load %arg6[%c0_35, %c0_36] : memref<32x128xbf16, #tpu.memory_space<vmem>>, vector<32x128xbf16>
    %cst_37 = arith.constant dense<0.000000e+00> : vector<16x128xf32>
    %106 = tpu.matmul %104, %105, %cst_37 {dimension_numbers = #tpu.dot_dimension_numbers<[1], [0], [0], [1], [0, 0, 1, 1], [], []>} : vector<16x32xbf16>, vector<32x128xbf16>, vector<16x128xf32> -> vector<16x128xf32>
    %c0_38 = arith.constant 0 : index
    %c0_39 = arith.constant 0 : index
    %107 = vector.load %arg7[%c0_38, %c0_39] : memref<1x128xf32, #tpu.memory_space<vmem>>, vector<1x128xf32>
    %108 = vector.broadcast %107 : vector<1x128xf32> to vector<16x128xf32>
    %109 = arith.addf %106, %108 : vector<16x128xf32>
    %cst_40 = arith.constant 5.000000e-01 : f32
    %110 = vector.broadcast %cst_40 : f32 to vector<16x128xf32>
    %111 = arith.mulf %110, %109 : vector<16x128xf32>
    %cst_41 = arith.constant 4.471500e-02 : f32
    %112 = vector.broadcast %cst_41 : f32 to vector<16x128xf32>
    %113 = arith.mulf %112, %109 : vector<16x128xf32>
    %114 = arith.mulf %113, %109 : vector<16x128xf32>
    %115 = arith.mulf %114, %109 : vector<16x128xf32>
    %116 = arith.addf %109, %115 : vector<16x128xf32>
    %cst_42 = arith.constant 0.797884583 : f32
    %117 = vector.broadcast %cst_42 : f32 to vector<16x128xf32>
    %118 = arith.mulf %117, %116 : vector<16x128xf32>
    %119 = math.tanh %118 : vector<16x128xf32>
    %cst_43 = arith.constant 1.000000e+00 : f32
    %120 = vector.broadcast %cst_43 : f32 to vector<16x128xf32>
    %121 = arith.addf %120, %119 : vector<16x128xf32>
    %122 = arith.mulf %111, %121 : vector<16x128xf32>
    %123 = arith.truncf %122 : vector<16x128xf32> to vector<16x128xbf16>
    %c0_44 = arith.constant 0 : index
    %c0_45 = arith.constant 0 : index
    %124 = vector.load %arg8[%c0_44, %c0_45] : memref<128x32xbf16, #tpu.memory_space<vmem>>, vector<128x32xbf16>
    %cst_46 = arith.constant dense<0.000000e+00> : vector<16x32xf32>
    %125 = tpu.matmul %123, %124, %cst_46 {dimension_numbers = #tpu.dot_dimension_numbers<[1], [0], [0], [1], [0, 0, 1, 1], [], []>} : vector<16x128xbf16>, vector<128x32xbf16>, vector<16x32xf32> -> vector<16x32xf32>
    %c0_47 = arith.constant 0 : index
    %c0_48 = arith.constant 0 : index
    %126 = vector.load %arg9[%c0_47, %c0_48] : memref<1x32xf32, #tpu.memory_space<vmem>>, vector<1x32xf32>
    %127 = vector.broadcast %126 : vector<1x32xf32> to vector<16x32xf32>
    %128 = arith.addf %125, %127 : vector<16x32xf32>
    %129 = arith.addf %79, %128 : vector<16x32xf32>
    %130 = vector.shape_cast %129 : vector<16x32xf32> to vector<2x8x32xf32>
    %c0_49 = arith.constant 0 : index
    %c0_50 = arith.constant 0 : index
    %c0_51 = arith.constant 0 : index
    %131 = vector.load %arg14[%c0_49, %c0_50, %c0_51] : memref<2x8x32xf32, #tpu.memory_space<vmem>>, vector<2x8x32xf32>
    tpu.vector_store %arg14[%c0_49, %c0_50, %c0_51], %130 {strides = array<i32>} : memref<2x8x32xf32, #tpu.memory_space<vmem>>, vector<2x8x32xf32>,
    return
  }
  func.func @transform_0(%arg0: i32) -> (i32, i32, i32) {
    %c0_i32 = arith.constant 0 : i32
    %c0_i32_0 = arith.constant 0 : i32
    %c0_i32_1 = arith.constant 0 : i32
    return %arg0, %c0_i32, %c0_i32_0 : i32, i32, i32
  }
  func.func @transform_1(%arg0: i32) -> (i32, i32) {
    %c0_i32 = arith.constant 0 : i32
    %c0_i32_0 = arith.constant 0 : i32
    %c0_i32_1 = arith.constant 0 : i32
    return %c0_i32, %c0_i32_0 : i32, i32
  }
  func.func @transform_2(%arg0: i32) -> (i32, i32) {
    %c0_i32 = arith.constant 0 : i32
    %c0_i32_0 = arith.constant 0 : i32
    %c0_i32_1 = arith.constant 0 : i32
    return %c0_i32, %c0_i32_0 : i32, i32
  }
  func.func @transform_3(%arg0: i32) -> (i32, i32) {
    %c0_i32 = arith.constant 0 : i32
    %c0_i32_0 = arith.constant 0 : i32
    %c0_i32_1 = arith.constant 0 : i32
    return %c0_i32, %c0_i32_0 : i32, i32
  }
  func.func @transform_4(%arg0: i32) -> (i32, i32) {
    %c0_i32 = arith.constant 0 : i32
    %c0_i32_0 = arith.constant 0 : i32
    %c0_i32_1 = arith.constant 0 : i32
    return %c0_i32, %c0_i32_0 : i32, i32
  }
  func.func @transform_5(%arg0: i32) -> (i32, i32) {
    %c0_i32 = arith.constant 0 : i32
    %c0_i32_0 = arith.constant 0 : i32
    %c0_i32_1 = arith.constant 0 : i32
    return %c0_i32, %c0_i32_0 : i32, i32
  }
  func.func @transform_6(%arg0: i32) -> (i32, i32) {
    %c0_i32 = arith.constant 0 : i32
    %c0_i32_0 = arith.constant 0 : i32
    %c0_i32_1 = arith.constant 0 : i32
    return %c0_i32, %c0_i32_0 : i32, i32
  }
  func.func @transform_7(%arg0: i32) -> (i32, i32) {
    %c0_i32 = arith.constant 0 : i32
    %c0_i32_0 = arith.constant 0 : i32
    %c0_i32_1 = arith.constant 0 : i32
    return %c0_i32, %c0_i32_0 : i32, i32
  }
  func.func @transform_8(%arg0: i32) -> (i32, i32) {
    %c0_i32 = arith.constant 0 : i32
    %c0_i32_0 = arith.constant 0 : i32
    %c0_i32_1 = arith.constant 0 : i32
    return %c0_i32, %c0_i32_0 : i32, i32
  }
  func.func @transform_9(%arg0: i32) -> (i32, i32) {
    %c0_i32 = arith.constant 0 : i32
    %c0_i32_0 = arith.constant 0 : i32
    %c0_i32_1 = arith.constant 0 : i32
    return %c0_i32, %c0_i32_0 : i32, i32
  }
  func.func @transform_10(%arg0: i32) -> (i32, i32) {
    %c0_i32 = arith.constant 0 : i32
    %c0_i32_0 = arith.constant 0 : i32
    %c0_i32_1 = arith.constant 0 : i32
    return %c0_i32, %c0_i32_0 : i32, i32
  }
  func.func @transform_11(%arg0: i32) -> (i32, i32) {
    %c0_i32 = arith.constant 0 : i32
    %c0_i32_0 = arith.constant 0 : i32
    %c0_i32_1 = arith.constant 0 : i32
    return %c0_i32, %c0_i32_0 : i32, i32
  }
  func.func @transform_12(%arg0: i32) -> (i32, i32) {
    %c0_i32 = arith.constant 0 : i32
    %c0_i32_0 = arith.constant 0 : i32
    %c0_i32_1 = arith.constant 0 : i32
    return %c0_i32, %c0_i32_0 : i32, i32
  }
  func.func @transform_13(%arg0: i32) -> (i32, i32, i32) {
    %c0_i32 = arith.constant 0 : i32
    %c0_i32_0 = arith.constant 0 : i32
    %c0_i32_1 = arith.constant 0 : i32
    return %arg0, %c0_i32, %c0_i32_0 : i32, i32, i32
  }
}

</mosaic_0001>

<llo_original>
// kernel: tpu_custom_call.1
$region0: #{tpu_custom_call.1}
  #allocation0 [shape = 'u32[]', space=smem, size = 0x4, offset = 0x4, fixed_abs, tag = 'smem constant byte address 0x4 - core index']
  #allocation1 [shape = 'u32[72,128]{1,0:T(1,128)}', space=vmem, size = 0x9000, scoped, tag = 'internal scratch']
  %s0 = inlined_call_operand.vmem [shape: f32[2,8,32], index: 0, kind: input, shape index: {}]
  %s1 = inlined_call_operand.vmem [shape: bf16[32,96], index: 1, kind: input, shape index: {}]
  %s2 = inlined_call_operand.vmem [shape: f32[1,96], index: 2, kind: input, shape index: {}]
  %s3 = inlined_call_operand.vmem [shape: bf16[32,32], index: 3, kind: input, shape index: {}]
  %s4 = inlined_call_operand.vmem [shape: f32[1,32], index: 4, kind: input, shape index: {}]
  %s5 = inlined_call_operand.vmem [shape: bf16[32,128], index: 5, kind: input, shape index: {}]
  %s6 = inlined_call_operand.vmem [shape: f32[1,128], index: 6, kind: input, shape index: {}]
  %s7 = inlined_call_operand.vmem [shape: bf16[128,32], index: 7, kind: input, shape index: {}]
  %s8 = inlined_call_operand.vmem [shape: f32[1,32], index: 8, kind: input, shape index: {}]
  %s9 = inlined_call_operand.vmem [shape: f32[1,32], index: 9, kind: input, shape index: {}]
  %s10 = inlined_call_operand.vmem [shape: f32[1,32], index: 10, kind: input, shape index: {}]
  %s11 = inlined_call_operand.vmem [shape: f32[1,32], index: 11, kind: input, shape index: {}]
  %s12 = inlined_call_operand.vmem [shape: f32[1,32], index: 12, kind: input, shape index: {}]
  %s13 = inlined_call_operand.hbm [shape: f32[2,8,32], index: 13, kind: output, shape index: {}]
  %s14 = sld [smem:[#allocation0]]
  $region62: #{tpu_custom_call.1} parent=0
    _
  %s16 = ssub.s32 1, %s14
  %s17 = scalar_select 0, %s16, %s14
  $region1: #{tpu_custom_call.1} parent=0
    #allocation2 [shape = 'u8[8192]{0}', space=vmem, size = 0x2000, scoped, tag = 'output window, operand 0, single buffered']
    #allocation3 [shape = 's32[1]{0}', space=sflag, size = 0x4, scoped, tag = 'scoped memory for tpu_custom_call.1']
    %18 = vsyncpa [#allocation3], 0
    // Predicated region
    $region2: #{tpu_custom_call.1} parent=1 // pred_check
      _
    $region3: #{tpu_custom_call.1} parent=1 // pred_check_branch
      %20 = sbr.rel (0) target = $region5
    $region4: #{tpu_custom_call.1} parent=1 // pred_region
      _
    $region5: #{tpu_custom_call.1} parent=1 // pred_fallthru
      _
    // Predicated region
    $region6: #{tpu_custom_call.1} parent=1 // pred_check
      _
    $region7: #{tpu_custom_call.1} parent=1 // pred_check_branch
      %22 = sbr.rel (0) target = $region9
    $region8: #{tpu_custom_call.1} parent=1 // pred_region
      _
    $region9: #{tpu_custom_call.1} parent=1 // pred_fallthru
      _
    // Predicated region
    $region10: #{tpu_custom_call.1} parent=1 // pred_check
      _
    $region11: #{tpu_custom_call.1} parent=1 // pred_check_branch
      %24 = sbr.rel (0) target = $region13
    $region12: #{tpu_custom_call.1} parent=1 // pred_region
      _
    $region13: #{tpu_custom_call.1} parent=1 // pred_fallthru
      _
    // Predicated region
    $region14: #{tpu_custom_call.1} parent=1 // pred_check
      _
    $region15: #{tpu_custom_call.1} parent=1 // pred_check_branch
      %26 = sbr.rel (0) target = $region17
    $region16: #{tpu_custom_call.1} parent=1 // pred_region
      _
    $region17: #{tpu_custom_call.1} parent=1 // pred_fallthru
      _
    // Predicated region
    $region18: #{tpu_custom_call.1} parent=1 // pred_check
      _
    $region19: #{tpu_custom_call.1} parent=1 // pred_check_branch
      %28 = sbr.rel (0) target = $region21
    $region20: #{tpu_custom_call.1} parent=1 // pred_region
      _
    $region21: #{tpu_custom_call.1} parent=1 // pred_fallthru
      _
    // Predicated region
    $region22: #{tpu_custom_call.1} parent=1 // pred_check
      _
    $region23: #{tpu_custom_call.1} parent=1 // pred_check_branch
      %30 = sbr.rel (0) target = $region25
    $region24: #{tpu_custom_call.1} parent=1 // pred_region
      _
    $region25: #{tpu_custom_call.1} parent=1 // pred_fallthru
      _
    // Predicated region
    $region26: #{tpu_custom_call.1} parent=1 // pred_check
      _
    $region27: #{tpu_custom_call.1} parent=1 // pred_check_branch
      %32 = sbr.rel (0) target = $region29
    $region28: #{tpu_custom_call.1} parent=1 // pred_region
      _
    $region29: #{tpu_custom_call.1} parent=1 // pred_fallthru
      _
    // Predicated region
    $region30: #{tpu_custom_call.1} parent=1 // pred_check
      _
    $region31: #{tpu_custom_call.1} parent=1 // pred_check_branch
      %34 = sbr.rel (0) target = $region33
    $region32: #{tpu_custom_call.1} parent=1 // pred_region
      _
    $region33: #{tpu_custom_call.1} parent=1 // pred_fallthru
      _
    // Predicated region
    $region34: #{tpu_custom_call.1} parent=1 // pred_check
      _
    $region35: #{tpu_custom_call.1} parent=1 // pred_check_branch
      %36 = sbr.rel (0) target = $region37
    $region36: #{tpu_custom_call.1} parent=1 // pred_region
      _
    $region37: #{tpu_custom_call.1} parent=1 // pred_fallthru
      _
    // Predicated region
    $region38: #{tpu_custom_call.1} parent=1 // pred_check
      _
    $region39: #{tpu_custom_call.1} parent=1 // pred_check_branch
      %38 = sbr.rel (0) target = $region41
    $region40: #{tpu_custom_call.1} parent=1 // pred_region
      _
    $region41: #{tpu_custom_call.1} parent=1 // pred_fallthru
      _
    // Predicated region
    $region42: #{tpu_custom_call.1} parent=1 // pred_check
      _
    $region43: #{tpu_custom_call.1} parent=1 // pred_check_branch
      %40 = sbr.rel (0) target = $region45
    $region44: #{tpu_custom_call.1} parent=1 // pred_region
      _
    $region45: #{tpu_custom_call.1} parent=1 // pred_fallthru
      _
    // Predicated region
    $region46: #{tpu_custom_call.1} parent=1 // pred_check
      _
    $region47: #{tpu_custom_call.1} parent=1 // pred_check_branch
      %42 = sbr.rel (0) target = $region49
    $region48: #{tpu_custom_call.1} parent=1 // pred_region
      _
    $region49: #{tpu_custom_call.1} parent=1 // pred_fallthru
      _
    // Predicated region
    $region50: #{tpu_custom_call.1} parent=1 // pred_check
      _
    $region51: #{tpu_custom_call.1} parent=1 // pred_check_branch
      %44 = sbr.rel (0) target = $region53
    $region52: #{tpu_custom_call.1} parent=1 // pred_region
      _
    $region53: #{tpu_custom_call.1} parent=1 // pred_fallthru
      _
    %v46 = vld [vmem:[%s0] sm:$0xff]
    %v47 = vld [vmem:[%s0 + $0x8] sm:$0xff]
    %v48 = vld [vmem:[%s9] sm:$0x1]
    %v49 = vld [vmem:[%s10] sm:$0x1]
    %vm50 = vcmask 261120
    %v51 = vsel %vm50, %v46, 0.0
    %52 = vadd.xlane.f32.xlu0 %v51
    %v53 = vpop.xlane.xlu0 %52
    %v54 = vsel %vm50, %v47, 0.0
    %55 = vadd.xlane.f32.xlu0 %v54
    %v56 = vpop.xlane.xlu0 %55
    %v57 = vrcp.pop 32.0
    %v58 = vmul.f32 32.0, %v57
    %v59 = vsub.f32 1.0, %v58
    %v60 = vmul.f32 %v57, %v59
    %v61 = vadd.f32 %v57, %v60
    %vm62 = vweird.f32 %v57
    %v63 = vsel %vm62, %v57, %v61
    %v64 = vmul.f32 %v53, %v63
    %v65 = vmul.f32 %v56, %v63
    %v66 = vsub.f32 %v46, %v64
    %v67 = vsub.f32 %v47, %v65
    %v68 = vmul.f32 %v66, %v66
    %v69 = vmul.f32 %v67, %v67
    %v70 = vsel %vm50, %v68, 0.0
    %71 = vadd.xlane.f32.xlu0 %v70
    %v72 = vpop.xlane.xlu0 %71
    %v73 = vsel %vm50, %v69, 0.0
    %74 = vadd.xlane.f32.xlu0 %v73
    %v75 = vpop.xlane.xlu0 %74
    %v76 = vmul.f32 %v72, %v63
    %v77 = vmul.f32 %v75, %v63
    %v78 = vadd.f32 %v76, 1e-05
    %v79 = vadd.f32 %v77, 1e-05
    %v80 = vrsqrt.pop %v78
    %v81 = vmul.f32 %v80, %v78
    %v82 = vmul.f32 %v81, %v80
    %v83 = vmul.f32 0.5, %v82
    %v84 = vsub.f32 1.5, %v83
    %v85 = vmul.f32 %v80, %v84
    %vm86 = vweird.f32 %v78
    %vm87 = vweird.f32 %v80
    %vm88 = vmor %vm86, %vm87
    %v89 = vsel %vm88, %v80, %v85
    %v90 = vrsqrt.pop %v79
    %v91 = vmul.f32 %v90, %v79
    %v92 = vmul.f32 %v91, %v90
    %v93 = vmul.f32 0.5, %v92
    %v94 = vsub.f32 1.5, %v93
    %v95 = vmul.f32 %v90, %v94
    %vm96 = vweird.f32 %v79
    %vm97 = vweird.f32 %v90
    %vm98 = vmor %vm96, %vm97
    %v99 = vsel %vm98, %v90, %v95
    %v100 = vmul.f32 %v66, %v89
    %v101 = vmul.f32 %v67, %v99
    %v103 = vperm.slane %v48, 0
    %v105 = vmul.f32 %v103, %v100
    %v106 = vmul.f32 %v103, %v101
    %v108 = vperm.slane %v49, 0
    %v110 = vadd.f32 %v105, %v108
    %v111 = vadd.f32 %v106, %v108
    %v112 = vpack.c.bf16 %v111, %v110
    %v113 = vld [vmem:[%s1] sm:$0xf]
    %v114 = vld [vmem:[%s1 + $0x4] sm:$0xf]
    %v115 = vld [vmem:[%s1 + $0x8] sm:$0xf]
    %v116 = vld [vmem:[%s1 + $0xc] sm:$0xf]
    %v117 = vld [vmem:[%s2] sm:$0x1]
    %v119 = vperm.slane %v117, 0
    %v125 = vunpack.c.l.b16 %v113
    %v126 = vunpack.c.l.b16 %v114
    %v127 = vunpack.c.l.b16 %v115
    %v128 = vunpack.c.l.b16 %v116
    %v129 = vpack.c.b16 %v126, %v125
    %v130 = vpack.c.b16 %v128, %v127
    %v134 = vsel %vm50, %v112, 0
    %136 = vmatpush.bf16.msra.mxu0 0
    %137 = vmatpush.bf16.msra.mxu0 0
    %138 = vmatpush.bf16.msra.mxu0 0
    %139 = vmatpush.bf16.msra.mxu0 0
    %140 = vmatpush.bf16.msra.mxu0 0
    %141 = vmatpush.bf16.msra.mxu0 0
    %142 = vmatpush.bf16.msra.mxu0 %v130
    %143 = vmatpush.bf16.msra.mxu0 %v129
    %144 = vmatmul.bf16.gmra.mxu0 %v134
    %v145 = vpop.f32.mrf.mxu0
    %v146 = vadd.f32 %v119, %v145
    %v147 = vpop.f32.mrf.mxu0
    %v148 = vadd.f32 %v119, %v147
    %149 = vdwg.mxu0
    %v150 = vmul.f32 %v146, 0.35355338
    %v151 = vmul.f32 %v148, 0.35355338
    %154 = vrot.lane.b32.xlu0 %v150, 120
    %v155 = vpop.permute.xlu0 %154
    %156 = vrot.lane.b32.xlu0 %v151, 120
    %v157 = vpop.permute.xlu0 %156
    %160 = vrot.lane.b32.xlu0 %v150, 112
    %v161 = vpop.permute.xlu0 %160
    %162 = vrot.lane.b32.xlu0 %v151, 112
    %v163 = vpop.permute.xlu0 %162
    %166 = vrot.lane.b32.xlu0 %v150, 104
    %v167 = vpop.permute.xlu0 %166
    %168 = vrot.lane.b32.xlu0 %v151, 104
    %v169 = vpop.permute.xlu0 %168
    %v172 = vrot.slane %v161, 4
    %vm173 = vcmask 1047556
    %v174 = vsel %vm173, %v172, %v150
    %v175 = vrot.slane %v150, 4
    %v176 = vsel %vm173, %v161, %v175
    %v178 = vunpack.c.l.s4 1983009808
    %v179 = vunpack.c.0.s8 %v178
    %v180 = vperm.slane %v174, %v179
    %v182 = vunpack.c.l.s4 1983009808
    %v183 = vunpack.c.0.s8 %v182
    %v184 = vperm.slane %v176, %v183
    %v185 = vrot.slane %v167, 4
    %v186 = vsel %vm173, %v185, %v155
    %v187 = vrot.slane %v155, 4
    %v188 = vsel %vm173, %v167, %v187
    %v190 = vunpack.c.l.s4 1983009808
    %v191 = vunpack.c.0.s8 %v190
    %v192 = vperm.slane %v186, %v191
    %v194 = vunpack.c.l.s4 1983009808
    %v195 = vunpack.c.0.s8 %v194
    %v196 = vperm.slane %v188, %v195
    %v197 = vrot.slane %v192, 4
    %v198 = vsel %vm173, %v197, %v180
    %v199 = vrot.slane %v180, 4
    %v200 = vsel %vm173, %v192, %v199
    %v202 = vunpack.c.l.s4 1934713408
    %v203 = vunpack.c.0.s8 %v202
    %v204 = vperm.slane %v198, %v203
    %v206 = vunpack.c.l.s4 1934713408
    %v207 = vunpack.c.0.s8 %v206
    %v208 = vperm.slane %v200, %v207
    %v209 = vrot.slane %v196, 4
    %v210 = vsel %vm173, %v209, %v184
    %v211 = vrot.slane %v184, 4
    %v212 = vsel %vm173, %v196, %v211
    %v214 = vunpack.c.l.s4 1934713408
    %v215 = vunpack.c.0.s8 %v214
    %v216 = vperm.slane %v210, %v215
    %v218 = vunpack.c.l.s4 1934713408
    %v219 = vunpack.c.0.s8 %v218
    %v220 = vperm.slane %v212, %v219
    %v221 = vrot.slane %v204, 4
    %v222 = vsel %vm173, 0.0, %v221
    %v223 = vrot.slane %v208, 4
    %v224 = vsel %vm173, 0.0, %v223
    %v225 = vrot.slane %v216, 4
    %v226 = vsel %vm173, 0.0, %v225
    %v227 = vrot.slane %v220, 4
    %v228 = vsel %vm173, 0.0, %v227
    %v229 = vrot.slane %v163, 4
    %v230 = vsel %vm173, %v229, %v151
    %v231 = vrot.slane %v151, 4
    %v232 = vsel %vm173, %v163, %v231
    %v234 = vunpack.c.l.s4 1983009808
    %v235 = vunpack.c.0.s8 %v234
    %v236 = vperm.slane %v230, %v235
    %v238 = vunpack.c.l.s4 1983009808
    %v239 = vunpack.c.0.s8 %v238
    %v240 = vperm.slane %v232, %v239
    %v241 = vrot.slane %v169, 4
    %v242 = vsel %vm173, %v241, %v157
    %v243 = vrot.slane %v157, 4
    %v244 = vsel %vm173, %v169, %v243
    %v246 = vunpack.c.l.s4 1983009808
    %v247 = vunpack.c.0.s8 %v246
    %v248 = vperm.slane %v242, %v247
    %v250 = vunpack.c.l.s4 1983009808
    %v251 = vunpack.c.0.s8 %v250
    %v252 = vperm.slane %v244, %v251
    %v253 = vrot.slane %v248, 4
    %v254 = vsel %vm173, %v253, %v236
    %v255 = vrot.slane %v236, 4
    %v256 = vsel %vm173, %v248, %v255
    %v258 = vunpack.c.l.s4 1934713408
    %v259 = vunpack.c.0.s8 %v258
    %v260 = vperm.slane %v254, %v259
    %v262 = vunpack.c.l.s4 1934713408
    %v263 = vunpack.c.0.s8 %v262
    %v264 = vperm.slane %v256, %v263
    %v265 = vrot.slane %v252, 4
    %v266 = vsel %vm173, %v265, %v240
    %v267 = vrot.slane %v240, 4
    %v268 = vsel %vm173, %v252, %v267
    %v270 = vunpack.c.l.s4 1934713408
    %v271 = vunpack.c.0.s8 %v270
    %v272 = vperm.slane %v266, %v271
    %v274 = vunpack.c.l.s4 1934713408
    %v275 = vunpack.c.0.s8 %v274
    %v276 = vperm.slane %v268, %v275
    %v277 = vrot.slane %v260, 4
    %v278 = vsel %vm173, 0.0, %v277
    %v279 = vrot.slane %v264, 4
    %v280 = vsel %vm173, 0.0, %v279
    %v281 = vrot.slane %v272, 4
    %v282 = vsel %vm173, 0.0, %v281
    %v283 = vrot.slane %v276, 4
    %v284 = vsel %vm173, 0.0, %v283
    %287 = vrot.lane.b32.xlu0 %v146, 120
    %v288 = vpop.permute.xlu0 %287
    %289 = vrot.lane.b32.xlu0 %v148, 120
    %v290 = vpop.permute.xlu0 %289
    %291 = vrot.lane.b32.xlu0 %v146, 112
    %v292 = vpop.permute.xlu0 %291
    %293 = vrot.lane.b32.xlu0 %v148, 112
    %v294 = vpop.permute.xlu0 %293
    %295 = vrot.lane.b32.xlu0 %v146, 104
    %v296 = vpop.permute.xlu0 %295
    %297 = vrot.lane.b32.xlu0 %v148, 104
    %v298 = vpop.permute.xlu0 %297
    %299 = vrot.lane.b32.xlu0 %v146, 96
    %v300 = vpop.permute.xlu0 %299
    %301 = vrot.lane.b32.xlu0 %v148, 96
    %v302 = vpop.permute.xlu0 %301
    %303 = vrot.lane.b32.xlu0 %v288, 96
    %v304 = vpop.permute.xlu0 %303
    %305 = vrot.lane.b32.xlu0 %v290, 96
    %v306 = vpop.permute.xlu0 %305
    %307 = vrot.lane.b32.xlu0 %v292, 96
    %v308 = vpop.permute.xlu0 %307
    %309 = vrot.lane.b32.xlu0 %v294, 96
    %v310 = vpop.permute.xlu0 %309
    %311 = vrot.lane.b32.xlu0 %v296, 96
    %v312 = vpop.permute.xlu0 %311
    %313 = vrot.lane.b32.xlu0 %v298, 96
    %v314 = vpop.permute.xlu0 %313
    %v323 = vrot.slane %v308, 4
    %v324 = vsel %vm173, %v323, %v300
    %v325 = vrot.slane %v300, 4
    %v326 = vsel %vm173, %v308, %v325
    %v328 = vunpack.c.l.s4 1983009808
    %v329 = vunpack.c.0.s8 %v328
    %v330 = vperm.slane %v324, %v329
    %v332 = vunpack.c.l.s4 1983009808
    %v333 = vunpack.c.0.s8 %v332
    %v334 = vperm.slane %v326, %v333
    %v335 = vrot.slane %v312, 4
    %v336 = vsel %vm173, %v335, %v304
    %v337 = vrot.slane %v304, 4
    %v338 = vsel %vm173, %v312, %v337
    %v340 = vunpack.c.l.s4 1983009808
    %v341 = vunpack.c.0.s8 %v340
    %v342 = vperm.slane %v336, %v341
    %v344 = vunpack.c.l.s4 1983009808
    %v345 = vunpack.c.0.s8 %v344
    %v346 = vperm.slane %v338, %v345
    %v347 = vrot.slane %v342, 4
    %v348 = vsel %vm173, %v347, %v330
    %v349 = vrot.slane %v330, 4
    %v350 = vsel %vm173, %v342, %v349
    %v352 = vunpack.c.l.s4 1934713408
    %v353 = vunpack.c.0.s8 %v352
    %v354 = vperm.slane %v348, %v353
    %v356 = vunpack.c.l.s4 1934713408
    %v357 = vunpack.c.0.s8 %v356
    %v358 = vperm.slane %v350, %v357
    %v359 = vrot.slane %v346, 4
    %v360 = vsel %vm173, %v359, %v334
    %v361 = vrot.slane %v334, 4
    %v362 = vsel %vm173, %v346, %v361
    %v364 = vunpack.c.l.s4 1934713408
    %v365 = vunpack.c.0.s8 %v364
    %v366 = vperm.slane %v360, %v365
    %v368 = vunpack.c.l.s4 1934713408
    %v369 = vunpack.c.0.s8 %v368
    %v370 = vperm.slane %v362, %v369
    %v371 = vrot.slane %v354, 4
    %v372 = vsel %vm173, 0.0, %v371
    %v373 = vrot.slane %v358, 4
    %v374 = vsel %vm173, 0.0, %v373
    %v375 = vrot.slane %v366, 4
    %v376 = vsel %vm173, 0.0, %v375
    %v377 = vrot.slane %v370, 4
    %v378 = vsel %vm173, 0.0, %v377
    %v379 = vrot.slane %v310, 4
    %v380 = vsel %vm173, %v379, %v302
    %v381 = vrot.slane %v302, 4
    %v382 = vsel %vm173, %v310, %v381
    %v384 = vunpack.c.l.s4 1983009808
    %v385 = vunpack.c.0.s8 %v384
    %v386 = vperm.slane %v380, %v385
    %v388 = vunpack.c.l.s4 1983009808
    %v389 = vunpack.c.0.s8 %v388
    %v390 = vperm.slane %v382, %v389
    %v391 = vrot.slane %v314, 4
    %v392 = vsel %vm173, %v391, %v306
    %v393 = vrot.slane %v306, 4
    %v394 = vsel %vm173, %v314, %v393
    %v396 = vunpack.c.l.s4 1983009808
    %v397 = vunpack.c.0.s8 %v396
    %v398 = vperm.slane %v392, %v397
    %v400 = vunpack.c.l.s4 1983009808
    %v401 = vunpack.c.0.s8 %v400
    %v402 = vperm.slane %v394, %v401
    %v403 = vrot.slane %v398, 4
    %v404 = vsel %vm173, %v403, %v386
    %v405 = vrot.slane %v386, 4
    %v406 = vsel %vm173, %v398, %v405
    %v408 = vunpack.c.l.s4 1934713408
    %v409 = vunpack.c.0.s8 %v408
    %v410 = vperm.slane %v404, %v409
    %v412 = vunpack.c.l.s4 1934713408
    %v413 = vunpack.c.0.s8 %v412
    %v414 = vperm.slane %v406, %v413
    %v415 = vrot.slane %v402, 4
    %v416 = vsel %vm173, %v415, %v390
    %v417 = vrot.slane %v390, 4
    %v418 = vsel %vm173, %v402, %v417
    %v420 = vunpack.c.l.s4 1934713408
    %v421 = vunpack.c.0.s8 %v420
    %v422 = vperm.slane %v416, %v421
    %v424 = vunpack.c.l.s4 1934713408
    %v425 = vunpack.c.0.s8 %v424
    %v426 = vperm.slane %v418, %v425
    %v427 = vrot.slane %v410, 4
    %v428 = vsel %vm173, 0.0, %v427
    %v429 = vrot.slane %v414, 4
    %v430 = vsel %vm173, 0.0, %v429
    %v431 = vrot.slane %v422, 4
    %v432 = vsel %vm173, 0.0, %v431
    %v433 = vrot.slane %v426, 4
    %v434 = vsel %vm173, 0.0, %v433
    %435 = vrot.lane.b32.xlu0 %v146, 64
    %v436 = vpop.permute.xlu0 %435
    %437 = vrot.lane.b32.xlu0 %v148, 64
    %v438 = vpop.permute.xlu0 %437
    %439 = vrot.lane.b32.xlu0 %v288, 64
    %v440 = vpop.permute.xlu0 %439
    %441 = vrot.lane.b32.xlu0 %v290, 64
    %v442 = vpop.permute.xlu0 %441
    %443 = vrot.lane.b32.xlu0 %v292, 64
    %v444 = vpop.permute.xlu0 %443
    %445 = vrot.lane.b32.xlu0 %v294, 64
    %v446 = vpop.permute.xlu0 %445
    %447 = vrot.lane.b32.xlu0 %v296, 64
    %v448 = vpop.permute.xlu0 %447
    %449 = vrot.lane.b32.xlu0 %v298, 64
    %v450 = vpop.permute.xlu0 %449
    %v459 = vrot.slane %v444, 4
    %v460 = vsel %vm173, %v459, %v436
    %v461 = vrot.slane %v436, 4
    %v462 = vsel %vm173, %v444, %v461
    %v464 = vunpack.c.l.s4 1983009808
    %v465 = vunpack.c.0.s8 %v464
    %v466 = vperm.slane %v460, %v465
    %v468 = vunpack.c.l.s4 1983009808
    %v469 = vunpack.c.0.s8 %v468
    %v470 = vperm.slane %v462, %v469
    %v471 = vrot.slane %v448, 4
    %v472 = vsel %vm173, %v471, %v440
    %v473 = vrot.slane %v440, 4
    %v474 = vsel %vm173, %v448, %v473
    %v476 = vunpack.c.l.s4 1983009808
    %v477 = vunpack.c.0.s8 %v476
    %v478 = vperm.slane %v472, %v477
    %v480 = vunpack.c.l.s4 1983009808
    %v481 = vunpack.c.0.s8 %v480
    %v482 = vperm.slane %v474, %v481
    %v483 = vrot.slane %v478, 4
    %v484 = vsel %vm173, %v483, %v466
    %v485 = vrot.slane %v466, 4
    %v486 = vsel %vm173, %v478, %v485
    %v488 = vunpack.c.l.s4 1934713408
    %v489 = vunpack.c.0.s8 %v488
    %v490 = vperm.slane %v484, %v489
    %v492 = vunpack.c.l.s4 1934713408
    %v493 = vunpack.c.0.s8 %v492
    %v494 = vperm.slane %v486, %v493
    %v495 = vrot.slane %v482, 4
    %v496 = vsel %vm173, %v495, %v470
    %v497 = vrot.slane %v470, 4
    %v498 = vsel %vm173, %v482, %v497
    %v500 = vunpack.c.l.s4 1934713408
    %v501 = vunpack.c.0.s8 %v500
    %v502 = vperm.slane %v496, %v501
    %v504 = vunpack.c.l.s4 1934713408
    %v505 = vunpack.c.0.s8 %v504
    %v506 = vperm.slane %v498, %v505
    %v507 = vrot.slane %v490, 4
    %v508 = vsel %vm173, 0.0, %v507
    %v509 = vrot.slane %v494, 4
    %v510 = vsel %vm173, 0.0, %v509
    %v511 = vrot.slane %v502, 4
    %v512 = vsel %vm173, 0.0, %v511
    %v513 = vrot.slane %v506, 4
    %v514 = vsel %vm173, 0.0, %v513
    %v515 = vrot.slane %v446, 4
    %v516 = vsel %vm173, %v515, %v438
    %v517 = vrot.slane %v438, 4
    %v518 = vsel %vm173, %v446, %v517
    %v520 = vunpack.c.l.s4 1983009808
    %v521 = vunpack.c.0.s8 %v520
    %v522 = vperm.slane %v516, %v521
    %v524 = vunpack.c.l.s4 1983009808
    %v525 = vunpack.c.0.s8 %v524
    %v526 = vperm.slane %v518, %v525
    %v527 = vrot.slane %v450, 4
    %v528 = vsel %vm173, %v527, %v442
    %v529 = vrot.slane %v442, 4
    %v530 = vsel %vm173, %v450, %v529
    %v532 = vunpack.c.l.s4 1983009808
    %v533 = vunpack.c.0.s8 %v532
    %v534 = vperm.slane %v528, %v533
    %v536 = vunpack.c.l.s4 1983009808
    %v537 = vunpack.c.0.s8 %v536
    %v538 = vperm.slane %v530, %v537
    %v539 = vrot.slane %v534, 4
    %v540 = vsel %vm173, %v539, %v522
    %v541 = vrot.slane %v522, 4
    %v542 = vsel %vm173, %v534, %v541
    %v544 = vunpack.c.l.s4 1934713408
    %v545 = vunpack.c.0.s8 %v544
    %v546 = vperm.slane %v540, %v545
    %v548 = vunpack.c.l.s4 1934713408
    %v549 = vunpack.c.0.s8 %v548
    %v550 = vperm.slane %v542, %v549
    %v551 = vrot.slane %v538, 4
    %v552 = vsel %vm173, %v551, %v526
    %v553 = vrot.slane %v526, 4
    %v554 = vsel %vm173, %v538, %v553
    %v556 = vunpack.c.l.s4 1934713408
    %v557 = vunpack.c.0.s8 %v556
    %v558 = vperm.slane %v552, %v557
    %v560 = vunpack.c.l.s4 1934713408
    %v561 = vunpack.c.0.s8 %v560
    %v562 = vperm.slane %v554, %v561
    %v563 = vrot.slane %v546, 4
    %v564 = vsel %vm173, 0.0, %v563
    %v565 = vrot.slane %v550, 4
    %v566 = vsel %vm173, 0.0, %v565
    %v567 = vrot.slane %v558, 4
    %v568 = vsel %vm173, 0.0, %v567
    %v569 = vrot.slane %v562, 4
    %v570 = vsel %vm173, 0.0, %v569
    %v571 = vsel %vm173, %v223, %v204
    %v573 = vunpack.c.l.s4 1983009808
    %v574 = vunpack.c.0.s8 %v573
    %v575 = vperm.slane %v571, %v574
    %v576 = vrot.slane %v224, 4
    %v577 = vsel %vm173, %v576, %v222
    %v579 = vunpack.c.l.s4 1983009808
    %v580 = vunpack.c.0.s8 %v579
    %v581 = vperm.slane %v577, %v580
    %v582 = vsel %vm173, %v227, %v216
    %v584 = vunpack.c.l.s4 1983009808
    %v585 = vunpack.c.0.s8 %v584
    %v586 = vperm.slane %v582, %v585
    %v587 = vrot.slane %v228, 4
    %v588 = vsel %vm173, %v587, %v226
    %v590 = vunpack.c.l.s4 1983009808
    %v591 = vunpack.c.0.s8 %v590
    %v592 = vperm.slane %v588, %v591
    %v593 = vrot.slane %v581, 4
    %v594 = vsel %vm173, %v593, %v575
    %v595 = vrot.slane %v575, 4
    %v596 = vsel %vm173, %v581, %v595
    %v598 = vunpack.c.l.s4 1934713408
    %v599 = vunpack.c.0.s8 %v598
    %v600 = vperm.slane %v594, %v599
    %v602 = vunpack.c.l.s4 1934713408
    %v603 = vunpack.c.0.s8 %v602
    %v604 = vperm.slane %v596, %v603
    %v605 = vrot.slane %v592, 4
    %v606 = vsel %vm173, %v605, %v586
    %v607 = vrot.slane %v586, 4
    %v608 = vsel %vm173, %v592, %v607
    %v610 = vunpack.c.l.s4 1934713408
    %v611 = vunpack.c.0.s8 %v610
    %v612 = vperm.slane %v606, %v611
    %v614 = vunpack.c.l.s4 1934713408
    %v615 = vunpack.c.0.s8 %v614
    %v616 = vperm.slane %v608, %v615
    %v617 = vrot.slane %v612, 4
    %v618 = vsel %vm173, %v617, %v600
    %v619 = vrot.slane %v600, 4
    %v620 = vsel %vm173, %v612, %v619
    %v621 = vrot.slane %v616, 4
    %v622 = vsel %vm173, %v621, %v604
    %v623 = vrot.slane %v604, 4
    %v624 = vsel %vm173, %v616, %v623
    %v625 = vsel %vm173, %v279, %v260
    %v627 = vunpack.c.l.s4 1983009808
    %v628 = vunpack.c.0.s8 %v627
    %v629 = vperm.slane %v625, %v628
    %v630 = vrot.slane %v280, 4
    %v631 = vsel %vm173, %v630, %v278
    %v633 = vunpack.c.l.s4 1983009808
    %v634 = vunpack.c.0.s8 %v633
    %v635 = vperm.slane %v631, %v634
    %v636 = vsel %vm173, %v283, %v272
    %v638 = vunpack.c.l.s4 1983009808
    %v639 = vunpack.c.0.s8 %v638
    %v640 = vperm.slane %v636, %v639
    %v641 = vrot.slane %v284, 4
    %v642 = vsel %vm173, %v641, %v282
    %v644 = vunpack.c.l.s4 1983009808
    %v645 = vunpack.c.0.s8 %v644
    %v646 = vperm.slane %v642, %v645
    %v647 = vrot.slane %v635, 4
    %v648 = vsel %vm173, %v647, %v629
    %v649 = vrot.slane %v629, 4
    %v650 = vsel %vm173, %v635, %v649
    %v652 = vunpack.c.l.s4 1934713408
    %v653 = vunpack.c.0.s8 %v652
    %v654 = vperm.slane %v648, %v653
    %v656 = vunpack.c.l.s4 1934713408
    %v657 = vunpack.c.0.s8 %v656
    %v658 = vperm.slane %v650, %v657
    %v659 = vrot.slane %v646, 4
    %v660 = vsel %vm173, %v659, %v640
    %v661 = vrot.slane %v640, 4
    %v662 = vsel %vm173, %v646, %v661
    %v664 = vunpack.c.l.s4 1934713408
    %v665 = vunpack.c.0.s8 %v664
    %v666 = vperm.slane %v660, %v665
    %v668 = vunpack.c.l.s4 1934713408
    %v669 = vunpack.c.0.s8 %v668
    %v670 = vperm.slane %v662, %v669
    %v671 = vrot.slane %v666, 4
    %v672 = vsel %vm173, %v671, %v654
    %v673 = vrot.slane %v654, 4
    %v674 = vsel %vm173, %v666, %v673
    %v675 = vrot.slane %v670, 4
    %v676 = vsel %vm173, %v675, %v658
    %v677 = vrot.slane %v658, 4
    %v678 = vsel %vm173, %v670, %v677
    %v679 = vpack.c.bf16 %v618, %v618
    %v680 = vpack.c.bf16 %v620, %v620
    %v681 = vpack.c.bf16 %v622, %v622
    %v682 = vpack.c.bf16 %v624, %v624
    %v683 = vpack.c.bf16 %v672, %v672
    %v684 = vpack.c.bf16 %v674, %v674
    %v685 = vpack.c.bf16 %v676, %v676
    %v686 = vpack.c.bf16 %v678, %v678
    %v687 = vsel %vm173, %v373, %v354
    %v689 = vunpack.c.l.s4 1983009808
    %v690 = vunpack.c.0.s8 %v689
    %v691 = vperm.slane %v687, %v690
    %v692 = vrot.slane %v374, 4
    %v693 = vsel %vm173, %v692, %v372
    %v695 = vunpack.c.l.s4 1983009808
    %v696 = vunpack.c.0.s8 %v695
    %v697 = vperm.slane %v693, %v696
    %v698 = vsel %vm173, %v377, %v366
    %v700 = vunpack.c.l.s4 1983009808
    %v701 = vunpack.c.0.s8 %v700
    %v702 = vperm.slane %v698, %v701
    %v703 = vrot.slane %v378, 4
    %v704 = vsel %vm173, %v703, %v376
    %v706 = vunpack.c.l.s4 1983009808
    %v707 = vunpack.c.0.s8 %v706
    %v708 = vperm.slane %v704, %v707
    %v709 = vrot.slane %v697, 4
    %v710 = vsel %vm173, %v709, %v691
    %v711 = vrot.slane %v691, 4
    %v712 = vsel %vm173, %v697, %v711
    %v714 = vunpack.c.l.s4 1934713408
    %v715 = vunpack.c.0.s8 %v714
    %v716 = vperm.slane %v710, %v715
    %v718 = vunpack.c.l.s4 1934713408
    %v719 = vunpack.c.0.s8 %v718
    %v720 = vperm.slane %v712, %v719
    %v721 = vrot.slane %v708, 4
    %v722 = vsel %vm173, %v721, %v702
    %v723 = vrot.slane %v702, 4
    %v724 = vsel %vm173, %v708, %v723
    %v726 = vunpack.c.l.s4 1934713408
    %v727 = vunpack.c.0.s8 %v726
    %v728 = vperm.slane %v722, %v727
    %v730 = vunpack.c.l.s4 1934713408
    %v731 = vunpack.c.0.s8 %v730
    %v732 = vperm.slane %v724, %v731
    %v733 = vrot.slane %v728, 4
    %v734 = vsel %vm173, %v733, %v716
    %v735 = vrot.slane %v716, 4
    %v736 = vsel %vm173, %v728, %v735
    %v737 = vrot.slane %v732, 4
    %v738 = vsel %vm173, %v737, %v720
    %v739 = vrot.slane %v720, 4
    %v740 = vsel %vm173, %v732, %v739
    %v741 = vsel %vm173, %v429, %v410
    %v743 = vunpack.c.l.s4 1983009808
    %v744 = vunpack.c.0.s8 %v743
    %v745 = vperm.slane %v741, %v744
    %v746 = vrot.slane %v430, 4
    %v747 = vsel %vm173, %v746, %v428
    %v749 = vunpack.c.l.s4 1983009808
    %v750 = vunpack.c.0.s8 %v749
    %v751 = vperm.slane %v747, %v750
    %v752 = vsel %vm173, %v433, %v422
    %v754 = vunpack.c.l.s4 1983009808
    %v755 = vunpack.c.0.s8 %v754
    %v756 = vperm.slane %v752, %v755
    %v757 = vrot.slane %v434, 4
    %v758 = vsel %vm173, %v757, %v432
    %v760 = vunpack.c.l.s4 1983009808
    %v761 = vunpack.c.0.s8 %v760
    %v762 = vperm.slane %v758, %v761
    %v763 = vrot.slane %v751, 4
    %v764 = vsel %vm173, %v763, %v745
    %v765 = vrot.slane %v745, 4
    %v766 = vsel %vm173, %v751, %v765
    %v768 = vunpack.c.l.s4 1934713408
    %v769 = vunpack.c.0.s8 %v768
    %v770 = vperm.slane %v764, %v769
    %v772 = vunpack.c.l.s4 1934713408
    %v773 = vunpack.c.0.s8 %v772
    %v774 = vperm.slane %v766, %v773
    %v775 = vrot.slane %v762, 4
    %v776 = vsel %vm173, %v775, %v756
    %v777 = vrot.slane %v756, 4
    %v778 = vsel %vm173, %v762, %v777
    %v780 = vunpack.c.l.s4 1934713408
    %v781 = vunpack.c.0.s8 %v780
    %v782 = vperm.slane %v776, %v781
    %v784 = vunpack.c.l.s4 1934713408
    %v785 = vunpack.c.0.s8 %v784
    %v786 = vperm.slane %v778, %v785
    %v787 = vrot.slane %v782, 4
    %v788 = vsel %vm173, %v787, %v770
    %v789 = vrot.slane %v770, 4
    %v790 = vsel %vm173, %v782, %v789
    %v791 = vrot.slane %v786, 4
    %v792 = vsel %vm173, %v791, %v774
    %v793 = vrot.slane %v774, 4
    %v794 = vsel %vm173, %v786, %v793
    %v795 = vpack.c.bf16 %v734, %v734
    %v796 = vpack.c.bf16 %v736, %v736
    %v797 = vpack.c.bf16 %v738, %v738
    %v798 = vpack.c.bf16 %v740, %v740
    %v799 = vpack.c.bf16 %v788, %v788
    %v800 = vpack.c.bf16 %v790, %v790
    %v801 = vpack.c.bf16 %v792, %v792
    %v802 = vpack.c.bf16 %v794, %v794
    %v803 = vsel %vm173, %v509, %v490
    %v805 = vunpack.c.l.s4 1983009808
    %v806 = vunpack.c.0.s8 %v805
    %v807 = vperm.slane %v803, %v806
    %v808 = vrot.slane %v510, 4
    %v809 = vsel %vm173, %v808, %v508
    %v811 = vunpack.c.l.s4 1983009808
    %v812 = vunpack.c.0.s8 %v811
    %v813 = vperm.slane %v809, %v812
    %v814 = vsel %vm173, %v513, %v502
    %v816 = vunpack.c.l.s4 1983009808
    %v817 = vunpack.c.0.s8 %v816
    %v818 = vperm.slane %v814, %v817
    %v819 = vrot.slane %v514, 4
    %v820 = vsel %vm173, %v819, %v512
    %v822 = vunpack.c.l.s4 1983009808
    %v823 = vunpack.c.0.s8 %v822
    %v824 = vperm.slane %v820, %v823
    %v825 = vrot.slane %v813, 4
    %v826 = vsel %vm173, %v825, %v807
    %v827 = vrot.slane %v807, 4
    %v828 = vsel %vm173, %v813, %v827
    %v830 = vunpack.c.l.s4 1934713408
    %v831 = vunpack.c.0.s8 %v830
    %v832 = vperm.slane %v826, %v831
    %v834 = vunpack.c.l.s4 1934713408
    %v835 = vunpack.c.0.s8 %v834
    %v836 = vperm.slane %v828, %v835
    %v837 = vrot.slane %v824, 4
    %v838 = vsel %vm173, %v837, %v818
    %v839 = vrot.slane %v818, 4
    %v840 = vsel %vm173, %v824, %v839
    %v842 = vunpack.c.l.s4 1934713408
    %v843 = vunpack.c.0.s8 %v842
    %v844 = vperm.slane %v838, %v843
    %v846 = vunpack.c.l.s4 1934713408
    %v847 = vunpack.c.0.s8 %v846
    %v848 = vperm.slane %v840, %v847
    %v849 = vrot.slane %v844, 4
    %v850 = vsel %vm173, %v849, %v832
    %v851 = vrot.slane %v832, 4
    %v852 = vsel %vm173, %v844, %v851
    %v853 = vrot.slane %v848, 4
    %v854 = vsel %vm173, %v853, %v836
    %v855 = vrot.slane %v836, 4
    %v856 = vsel %vm173, %v848, %v855
    %v857 = vsel %vm173, %v565, %v546
    %v859 = vunpack.c.l.s4 1983009808
    %v860 = vunpack.c.0.s8 %v859
    %v861 = vperm.slane %v857, %v860
    %v862 = vrot.slane %v566, 4
    %v863 = vsel %vm173, %v862, %v564
    %v865 = vunpack.c.l.s4 1983009808
    %v866 = vunpack.c.0.s8 %v865
    %v867 = vperm.slane %v863, %v866
    %v868 = vsel %vm173, %v569, %v558
    %v870 = vunpack.c.l.s4 1983009808
    %v871 = vunpack.c.0.s8 %v870
    %v872 = vperm.slane %v868, %v871
    %v873 = vrot.slane %v570, 4
    %v874 = vsel %vm173, %v873, %v568
    %v876 = vunpack.c.l.s4 1983009808
    %v877 = vunpack.c.0.s8 %v876
    %v878 = vperm.slane %v874, %v877
    %v879 = vrot.slane %v867, 4
    %v880 = vsel %vm173, %v879, %v861
    %v881 = vrot.slane %v861, 4
    %v882 = vsel %vm173, %v867, %v881
    %v884 = vunpack.c.l.s4 1934713408
    %v885 = vunpack.c.0.s8 %v884
    %v886 = vperm.slane %v880, %v885
    %v888 = vunpack.c.l.s4 1934713408
    %v889 = vunpack.c.0.s8 %v888
    %v890 = vperm.slane %v882, %v889
    %v891 = vrot.slane %v878, 4
    %v892 = vsel %vm173, %v891, %v872
    %v893 = vrot.slane %v872, 4
    %v894 = vsel %vm173, %v878, %v893
    %v896 = vunpack.c.l.s4 1934713408
    %v897 = vunpack.c.0.s8 %v896
    %v898 = vperm.slane %v892, %v897
    %v900 = vunpack.c.l.s4 1934713408
    %v901 = vunpack.c.0.s8 %v900
    %v902 = vperm.slane %v894, %v901
    %v903 = vrot.slane %v898, 4
    %v904 = vsel %vm173, %v903, %v886
    %v905 = vrot.slane %v886, 4
    %v906 = vsel %vm173, %v898, %v905
    %v907 = vrot.slane %v902, 4
    %v908 = vsel %vm173, %v907, %v890
    %v909 = vrot.slane %v890, 4
    %v910 = vsel %vm173, %v902, %v909
    %v911 = vpack.c.bf16 %v850, %v850
    %v912 = vpack.c.bf16 %v852, %v852
    %v913 = vpack.c.bf16 %v854, %v854
    %v914 = vpack.c.bf16 %v856, %v856
    %v915 = vpack.c.bf16 %v904, %v904
    %v916 = vpack.c.bf16 %v906, %v906
    %v917 = vpack.c.bf16 %v908, %v908
    %v918 = vpack.c.bf16 %v910, %v910
    %vm919 = vcmask 64512
    %v921 = vsel %vm919, %v679, 0
    %v924 = vsel %vm919, %v795, 0
    %926 = vmatpush.bf16.xpose.msra.mxu0 0
    %927 = vmatpush.bf16.xpose.msra.mxu0 0
    %928 = vmatpush.bf16.xpose.msra.mxu0 0
    %929 = vmatpush.bf16.xpose.msra.mxu0 0
    %930 = vmatpush.bf16.xpose.msra.mxu0 0
    %931 = vmatpush.bf16.xpose.msra.mxu0 0
    %932 = vmatpush.bf16.xpose.msra.mxu0 0
    %933 = vmatpush.bf16.xpose.msra.mxu0 %v924
    %934 = vmatmul.bf16.gmra.mxu0 %v921
    %v935 = vpop.f32.mrf.mxu0
    %v936 = vadd.f32 0.0, %v935
    %v937 = vpop.f32.mrf.mxu0
    %938 = vdwg.mxu0
    %v940 = vsel %vm919, %v680, 0
    %v943 = vsel %vm919, %v796, 0
    %945 = vmatpush.bf16.xpose.msra.mxu0 0
    %946 = vmatpush.bf16.xpose.msra.mxu0 0
    %947 = vmatpush.bf16.xpose.msra.mxu0 0
    %948 = vmatpush.bf16.xpose.msra.mxu0 0
    %949 = vmatpush.bf16.xpose.msra.mxu0 0
    %950 = vmatpush.bf16.xpose.msra.mxu0 0
    %951 = vmatpush.bf16.xpose.msra.mxu0 0
    %952 = vmatpush.bf16.xpose.msra.mxu0 %v943
    %953 = vmatmul.bf16.gmra.mxu0 %v940
    %v954 = vpop.f32.mrf.mxu0
    %v955 = vadd.f32 0.0, %v954
    %v956 = vpop.f32.mrf.mxu0
    %957 = vdwg.mxu0
    %v959 = vsel %vm919, %v681, 0
    %v962 = vsel %vm919, %v797, 0
    %964 = vmatpush.bf16.xpose.msra.mxu0 0
    %965 = vmatpush.bf16.xpose.msra.mxu0 0
    %966 = vmatpush.bf16.xpose.msra.mxu0 0
    %967 = vmatpush.bf16.xpose.msra.mxu0 0
    %968 = vmatpush.bf16.xpose.msra.mxu0 0
    %969 = vmatpush.bf16.xpose.msra.mxu0 0
    %970 = vmatpush.bf16.xpose.msra.mxu0 0
    %971 = vmatpush.bf16.xpose.msra.mxu0 %v962
    %972 = vmatmul.bf16.gmra.mxu0 %v959
    %v973 = vpop.f32.mrf.mxu0
    %v974 = vadd.f32 0.0, %v973
    %v975 = vpop.f32.mrf.mxu0
    %976 = vdwg.mxu0
    %v978 = vsel %vm919, %v682, 0
    %v981 = vsel %vm919, %v798, 0
    %983 = vmatpush.bf16.xpose.msra.mxu0 0
    %984 = vmatpush.bf16.xpose.msra.mxu0 0
    %985 = vmatpush.bf16.xpose.msra.mxu0 0
    %986 = vmatpush.bf16.xpose.msra.mxu0 0
    %987 = vmatpush.bf16.xpose.msra.mxu0 0
    %988 = vmatpush.bf16.xpose.msra.mxu0 0
    %989 = vmatpush.bf16.xpose.msra.mxu0 0
    %990 = vmatpush.bf16.xpose.msra.mxu0 %v981
    %991 = vmatmul.bf16.gmra.mxu0 %v978
    %v992 = vpop.f32.mrf.mxu0
    %v993 = vadd.f32 0.0, %v992
    %v994 = vpop.f32.mrf.mxu0
    %995 = vdwg.mxu0
    %v997 = vsel %vm919, %v683, 0
    %v1000 = vsel %vm919, %v799, 0
    %1002 = vmatpush.bf16.xpose.msra.mxu0 0
    %1003 = vmatpush.bf16.xpose.msra.mxu0 0
    %1004 = vmatpush.bf16.xpose.msra.mxu0 0
    %1005 = vmatpush.bf16.xpose.msra.mxu0 0
    %1006 = vmatpush.bf16.xpose.msra.mxu0 0
    %1007 = vmatpush.bf16.xpose.msra.mxu0 0
    %1008 = vmatpush.bf16.xpose.msra.mxu0 0
    %1009 = vmatpush.bf16.xpose.msra.mxu0 %v1000
    %1010 = vmatmul.bf16.gmra.mxu0 %v997
    %v1011 = vpop.f32.mrf.mxu0
    %v1012 = vadd.f32 0.0, %v1011
    %v1013 = vpop.f32.mrf.mxu0
    %1014 = vdwg.mxu0
    %v1016 = vsel %vm919, %v684, 0
    %v1019 = vsel %vm919, %v800, 0
    %1021 = vmatpush.bf16.xpose.msra.mxu0 0
    %1022 = vmatpush.bf16.xpose.msra.mxu0 0
    %1023 = vmatpush.bf16.xpose.msra.mxu0 0
    %1024 = vmatpush.bf16.xpose.msra.mxu0 0
    %1025 = vmatpush.bf16.xpose.msra.mxu0 0
    %1026 = vmatpush.bf16.xpose.msra.mxu0 0
    %1027 = vmatpush.bf16.xpose.msra.mxu0 0
    %1028 = vmatpush.bf16.xpose.msra.mxu0 %v1019
    %1029 = vmatmul.bf16.gmra.mxu0 %v1016
    %v1030 = vpop.f32.mrf.mxu0
    %v1031 = vadd.f32 0.0, %v1030
    %v1032 = vpop.f32.mrf.mxu0
    %1033 = vdwg.mxu0
    %v1035 = vsel %vm919, %v685, 0
    %v1038 = vsel %vm919, %v801, 0
    %1040 = vmatpush.bf16.xpose.msra.mxu0 0
    %1041 = vmatpush.bf16.xpose.msra.mxu0 0
    %1042 = vmatpush.bf16.xpose.msra.mxu0 0
    %1043 = vmatpush.bf16.xpose.msra.mxu0 0
    %1044 = vmatpush.bf16.xpose.msra.mxu0 0
    %1045 = vmatpush.bf16.xpose.msra.mxu0 0
    %1046 = vmatpush.bf16.xpose.msra.mxu0 0
    %1047 = vmatpush.bf16.xpose.msra.mxu0 %v1038
    %1048 = vmatmul.bf16.gmra.mxu0 %v1035
    %v1049 = vpop.f32.mrf.mxu0
    %v1050 = vadd.f32 0.0, %v1049
    %v1051 = vpop.f32.mrf.mxu0
    %1052 = vdwg.mxu0
    %v1054 = vsel %vm919, %v686, 0
    %v1057 = vsel %vm919, %v802, 0
    %1059 = vmatpush.bf16.xpose.msra.mxu0 0
    %1060 = vmatpush.bf16.xpose.msra.mxu0 0
    %1061 = vmatpush.bf16.xpose.msra.mxu0 0
    %1062 = vmatpush.bf16.xpose.msra.mxu0 0
    %1063 = vmatpush.bf16.xpose.msra.mxu0 0
    %1064 = vmatpush.bf16.xpose.msra.mxu0 0
    %1065 = vmatpush.bf16.xpose.msra.mxu0 0
    %1066 = vmatpush.bf16.xpose.msra.mxu0 %v1057
    %1067 = vmatmul.bf16.gmra.mxu0 %v1054
    %v1068 = vpop.f32.mrf.mxu0
    %v1069 = vadd.f32 0.0, %v1068
    %v1070 = vpop.f32.mrf.mxu0
    %1071 = vdwg.mxu0
    %v1072 = vlaneseq
    %v1073 = vshrl.u32 %v1072, 7
    %v1074 = vlaneseq
    %v1075 = vand.u32 %v1074, 127
    %vm1076 = vcmp.gt.s32.totalorder %v1075, %v1073
    %v1077 = vsel %vm1076, 1, 0
    %vm1078 = vcmp.eq.s32.totalorder %v1077, 1
    %v1079 = vsel %vm1078, -1e+30, %v936
    %v1080 = vsel %vm1078, -1e+30, %v955
    %v1081 = vsel %vm1078, -1e+30, %v974
    %v1082 = vsel %vm1078, -1e+30, %v993
    %v1083 = vsel %vm1078, -1e+30, %v1012
    %v1084 = vsel %vm1078, -1e+30, %v1031
    %v1085 = vsel %vm1078, -1e+30, %v1050
    %v1086 = vsel %vm1078, -1e+30, %v1069
    %v1087 = vsel %vm919, %v1079, -inf
    %1088 = vmax.xlane.f32.xlu0 %v1087
    %v1089 = vpop.xlane.xlu0 %1088
    %v1090 = vsel %vm919, %v1080, -inf
    %1091 = vmax.xlane.f32.xlu0 %v1090
    %v1092 = vpop.xlane.xlu0 %1091
    %v1093 = vsel %vm919, %v1081, -inf
    %1094 = vmax.xlane.f32.xlu0 %v1093
    %v1095 = vpop.xlane.xlu0 %1094
    %v1096 = vsel %vm919, %v1082, -inf
    %1097 = vmax.xlane.f32.xlu0 %v1096
    %v1098 = vpop.xlane.xlu0 %1097
    %v1099 = vsel %vm919, %v1083, -inf
    %1100 = vmax.xlane.f32.xlu0 %v1099
    %v1101 = vpop.xlane.xlu0 %1100
    %v1102 = vsel %vm919, %v1084, -inf
    %1103 = vmax.xlane.f32.xlu0 %v1102
    %v1104 = vpop.xlane.xlu0 %1103
    %v1105 = vsel %vm919, %v1085, -inf
    %1106 = vmax.xlane.f32.xlu0 %v1105
    %v1107 = vpop.xlane.xlu0 %1106
    %v1108 = vsel %vm919, %v1086, -inf
    %1109 = vmax.xlane.f32.xlu0 %v1108
    %v1110 = vpop.xlane.xlu0 %1109
    %v1111 = vsub.f32 %v1079, %v1089
    %v1112 = vsub.f32 %v1080, %v1092
    %v1113 = vsub.f32 %v1081, %v1095
    %v1114 = vsub.f32 %v1082, %v1098
    %v1115 = vsub.f32 %v1083, %v1101
    %v1116 = vsub.f32 %v1084, %v1104
    %v1117 = vsub.f32 %v1085, %v1107
    %v1118 = vsub.f32 %v1086, %v1110
    %v1119 = vmul.f32 %v1111, 1.442695
    %v1120 = vpow.pop %v1119
    %v1121 = vmul.f32 %v1112, 1.442695
    %v1122 = vpow.pop %v1121
    %v1123 = vmul.f32 %v1113, 1.442695
    %v1124 = vpow.pop %v1123
    %v1125 = vmul.f32 %v1114, 1.442695
    %v1126 = vpow.pop %v1125
    %v1127 = vmul.f32 %v1115, 1.442695
    %v1128 = vpow.pop %v1127
    %v1129 = vmul.f32 %v1116, 1.442695
    %v1130 = vpow.pop %v1129
    %v1131 = vmul.f32 %v1117, 1.442695
    %v1132 = vpow.pop %v1131
    %v1133 = vmul.f32 %v1118, 1.442695
    %v1134 = vpow.pop %v1133
    %v1135 = vsel %vm919, %v1120, 0.0
    %1136 = vadd.xlane.f32.xlu0 %v1135
    %v1137 = vpop.xlane.xlu0 %1136
    %v1138 = vsel %vm919, %v1122, 0.0
    %1139 = vadd.xlane.f32.xlu0 %v1138
    %v1140 = vpop.xlane.xlu0 %1139
    %v1141 = vsel %vm919, %v1124, 0.0
    %1142 = vadd.xlane.f32.xlu0 %v1141
    %v1143 = vpop.xlane.xlu0 %1142
    %v1144 = vsel %vm919, %v1126, 0.0
    %1145 = vadd.xlane.f32.xlu0 %v1144
    %v1146 = vpop.xlane.xlu0 %1145
    %v1147 = vsel %vm919, %v1128, 0.0
    %1148 = vadd.xlane.f32.xlu0 %v1147
    %v1149 = vpop.xlane.xlu0 %1148
    %v1150 = vsel %vm919, %v1130, 0.0
    %1151 = vadd.xlane.f32.xlu0 %v1150
    %v1152 = vpop.xlane.xlu0 %1151
    %v1153 = vsel %vm919, %v1132, 0.0
    %1154 = vadd.xlane.f32.xlu0 %v1153
    %v1155 = vpop.xlane.xlu0 %1154
    %v1156 = vsel %vm919, %v1134, 0.0
    %1157 = vadd.xlane.f32.xlu0 %v1156
    %v1158 = vpop.xlane.xlu0 %1157
    %v1159 = vrcp.pop %v1137
    %v1160 = vrcp.pop %v1140
    %v1161 = vrcp.pop %v1143
    %v1162 = vrcp.pop %v1146
    %v1163 = vrcp.pop %v1149
    %v1164 = vrcp.pop %v1152
    %v1165 = vrcp.pop %v1155
    %v1166 = vrcp.pop %v1158
    %v1167 = vmul.f32 %v1120, %v1159
    %v1168 = vmul.f32 %v1122, %v1160
    %v1169 = vmul.f32 %v1124, %v1161
    %v1170 = vmul.f32 %v1126, %v1162
    %v1171 = vmul.f32 %v1128, %v1163
    %v1172 = vmul.f32 %v1130, %v1164
    %v1173 = vmul.f32 %v1132, %v1165
    %v1174 = vmul.f32 %v1134, %v1166
    %v1175 = vpack.c.bf16 %v1167, %v1167
    %v1176 = vpack.c.bf16 %v1168, %v1168
    %v1177 = vpack.c.bf16 %v1169, %v1169
    %v1178 = vpack.c.bf16 %v1170, %v1170
    %v1179 = vpack.c.bf16 %v1171, %v1171
    %v1180 = vpack.c.bf16 %v1172, %v1172
    %v1181 = vpack.c.bf16 %v1173, %v1173
    %v1182 = vpack.c.bf16 %v1174, %v1174
    %v1184 = vsel %vm919, %v1175, 0
    %vm1186 = vcmask 1043456
    %v1188 = vsel %vm1186, %v911, 0
    %1190 = vmatpush.bf16.msra.mxu0 0
    %1191 = vmatpush.bf16.msra.mxu0 0
    %1192 = vmatpush.bf16.msra.mxu0 0
    %1193 = vmatpush.bf16.msra.mxu0 0
    %1194 = vmatpush.bf16.msra.mxu0 0
    %1195 = vmatpush.bf16.msra.mxu0 0
    %1196 = vmatpush.bf16.msra.mxu0 0
    %1197 = vmatpush.bf16.msra.mxu0 %v1188
    %1198 = vmatmul.bf16.gmra.mxu0 %v1184
    %v1199 = vpop.f32.mrf.mxu0
    %v1200 = vadd.f32 0.0, %v1199
    %v1201 = vpop.f32.mrf.mxu0
    %1202 = vdwg.mxu0
    %v1204 = vsel %vm919, %v1176, 0
    %v1207 = vsel %vm1186, %v912, 0
    %1209 = vmatpush.bf16.msra.mxu0 0
    %1210 = vmatpush.bf16.msra.mxu0 0
    %1211 = vmatpush.bf16.msra.mxu0 0
    %1212 = vmatpush.bf16.msra.mxu0 0
    %1213 = vmatpush.bf16.msra.mxu0 0
    %1214 = vmatpush.bf16.msra.mxu0 0
    %1215 = vmatpush.bf16.msra.mxu0 0
    %1216 = vmatpush.bf16.msra.mxu0 %v1207
    %1217 = vmatmul.bf16.gmra.mxu0 %v1204
    %v1218 = vpop.f32.mrf.mxu0
    %v1219 = vadd.f32 0.0, %v1218
    %v1220 = vpop.f32.mrf.mxu0
    %1221 = vdwg.mxu0
    %v1223 = vsel %vm919, %v1177, 0
    %v1226 = vsel %vm1186, %v913, 0
    %1228 = vmatpush.bf16.msra.mxu0 0
    %1229 = vmatpush.bf16.msra.mxu0 0
    %1230 = vmatpush.bf16.msra.mxu0 0
    %1231 = vmatpush.bf16.msra.mxu0 0
    %1232 = vmatpush.bf16.msra.mxu0 0
    %1233 = vmatpush.bf16.msra.mxu0 0
    %1234 = vmatpush.bf16.msra.mxu0 0
    %1235 = vmatpush.bf16.msra.mxu0 %v1226
    %1236 = vmatmul.bf16.gmra.mxu0 %v1223
    %v1237 = vpop.f32.mrf.mxu0
    %v1238 = vadd.f32 0.0, %v1237
    %v1239 = vpop.f32.mrf.mxu0
    %1240 = vdwg.mxu0
    %v1242 = vsel %vm919, %v1178, 0
    %v1245 = vsel %vm1186, %v914, 0
    %1247 = vmatpush.bf16.msra.mxu0 0
    %1248 = vmatpush.bf16.msra.mxu0 0
    %1249 = vmatpush.bf16.msra.mxu0 0
    %1250 = vmatpush.bf16.msra.mxu0 0
    %1251 = vmatpush.bf16.msra.mxu0 0
    %1252 = vmatpush.bf16.msra.mxu0 0
    %1253 = vmatpush.bf16.msra.mxu0 0
    %1254 = vmatpush.bf16.msra.mxu0 %v1245
    %1255 = vmatmul.bf16.gmra.mxu0 %v1242
    %v1256 = vpop.f32.mrf.mxu0
    %v1257 = vadd.f32 0.0, %v1256
    %v1258 = vpop.f32.mrf.mxu0
    %1259 = vdwg.mxu0
    %v1261 = vsel %vm919, %v1179, 0
    %v1264 = vsel %vm1186, %v915, 0
    %1266 = vmatpush.bf16.msra.mxu0 0
    %1267 = vmatpush.bf16.msra.mxu0 0
    %1268 = vmatpush.bf16.msra.mxu0 0
    %1269 = vmatpush.bf16.msra.mxu0 0
    %1270 = vmatpush.bf16.msra.mxu0 0
    %1271 = vmatpush.bf16.msra.mxu0 0
    %1272 = vmatpush.bf16.msra.mxu0 0
    %1273 = vmatpush.bf16.msra.mxu0 %v1264
    %1274 = vmatmul.bf16.gmra.mxu0 %v1261
    %v1275 = vpop.f32.mrf.mxu0
    %v1276 = vadd.f32 0.0, %v1275
    %v1277 = vpop.f32.mrf.mxu0
    %1278 = vdwg.mxu0
    %v1280 = vsel %vm919, %v1180, 0
    %v1283 = vsel %vm1186, %v916, 0
    %1285 = vmatpush.bf16.msra.mxu0 0
    %1286 = vmatpush.bf16.msra.mxu0 0
    %1287 = vmatpush.bf16.msra.mxu0 0
    %1288 = vmatpush.bf16.msra.mxu0 0
    %1289 = vmatpush.bf16.msra.mxu0 0
    %1290 = vmatpush.bf16.msra.mxu0 0
    %1291 = vmatpush.bf16.msra.mxu0 0
    %1292 = vmatpush.bf16.msra.mxu0 %v1283
    %1293 = vmatmul.bf16.gmra.mxu0 %v1280
    %v1294 = vpop.f32.mrf.mxu0
    %v1295 = vadd.f32 0.0, %v1294
    %v1296 = vpop.f32.mrf.mxu0
    %1297 = vdwg.mxu0
    %v1299 = vsel %vm919, %v1181, 0
    %v1302 = vsel %vm1186, %v917, 0
    %1304 = vmatpush.bf16.msra.mxu0 0
    %1305 = vmatpush.bf16.msra.mxu0 0
    %1306 = vmatpush.bf16.msra.mxu0 0
    %1307 = vmatpush.bf16.msra.mxu0 0
    %1308 = vmatpush.bf16.msra.mxu0 0
    %1309 = vmatpush.bf16.msra.mxu0 0
    %1310 = vmatpush.bf16.msra.mxu0 0
    %1311 = vmatpush.bf16.msra.mxu0 %v1302
    %1312 = vmatmul.bf16.gmra.mxu0 %v1299
    %v1313 = vpop.f32.mrf.mxu0
    %v1314 = vadd.f32 0.0, %v1313
    %v1315 = vpop.f32.mrf.mxu0
    %1316 = vdwg.mxu0
    %v1318 = vsel %vm919, %v1182, 0
    %v1321 = vsel %vm1186, %v918, 0
    %1323 = vmatpush.bf16.msra.mxu0 0
    %1324 = vmatpush.bf16.msra.mxu0 0
    %1325 = vmatpush.bf16.msra.mxu0 0
    %1326 = vmatpush.bf16.msra.mxu0 0
    %1327 = vmatpush.bf16.msra.mxu0 0
    %1328 = vmatpush.bf16.msra.mxu0 0
    %1329 = vmatpush.bf16.msra.mxu0 0
    %1330 = vmatpush.bf16.msra.mxu0 %v1321
    %1331 = vmatmul.bf16.gmra.mxu0 %v1318
    %v1332 = vpop.f32.mrf.mxu0
    %v1333 = vadd.f32 0.0, %v1332
    %v1334 = vpop.f32.mrf.mxu0
    %1335 = vdwg.mxu0
    %v1336 = vrot.slane %v1238, 4
    %v1337 = vsel %vm173, %v1336, %v1200
    %v1338 = vrot.slane %v1200, 4
    %v1339 = vsel %vm173, %v1238, %v1338
    %v1341 = vunpack.c.l.s4 1983009808
    %v1342 = vunpack.c.0.s8 %v1341
    %v1343 = vperm.slane %v1337, %v1342
    %v1345 = vunpack.c.l.s4 1983009808
    %v1346 = vunpack.c.0.s8 %v1345
    %v1347 = vperm.slane %v1339, %v1346
    %v1348 = vrot.slane %v1257, 4
    %v1349 = vsel %vm173, %v1348, %v1219
    %v1350 = vrot.slane %v1219, 4
    %v1351 = vsel %vm173, %v1257, %v1350
    %v1353 = vunpack.c.l.s4 1983009808
    %v1354 = vunpack.c.0.s8 %v1353
    %v1355 = vperm.slane %v1349, %v1354
    %v1357 = vunpack.c.l.s4 1983009808
    %v1358 = vunpack.c.0.s8 %v1357
    %v1359 = vperm.slane %v1351, %v1358
    %v1360 = vrot.slane %v1355, 4
    %v1361 = vsel %vm173, %v1360, %v1343
    %v1362 = vrot.slane %v1343, 4
    %v1363 = vsel %vm173, %v1355, %v1362
    %v1365 = vunpack.c.l.s4 1934713408
    %v1366 = vunpack.c.0.s8 %v1365
    %v1367 = vperm.slane %v1361, %v1366
    %v1369 = vunpack.c.l.s4 1934713408
    %v1370 = vunpack.c.0.s8 %v1369
    %v1371 = vperm.slane %v1363, %v1370
    %v1372 = vrot.slane %v1359, 4
    %v1373 = vsel %vm173, %v1372, %v1347
    %v1374 = vrot.slane %v1347, 4
    %v1375 = vsel %vm173, %v1359, %v1374
    %v1377 = vunpack.c.l.s4 1934713408
    %v1378 = vunpack.c.0.s8 %v1377
    %v1379 = vperm.slane %v1373, %v1378
    %v1381 = vunpack.c.l.s4 1934713408
    %v1382 = vunpack.c.0.s8 %v1381
    %v1383 = vperm.slane %v1375, %v1382
    %v1384 = vrot.slane %v1367, 4
    %v1385 = vsel %vm173, 0.0, %v1384
    %v1386 = vrot.slane %v1371, 4
    %v1387 = vsel %vm173, 0.0, %v1386
    %v1388 = vrot.slane %v1379, 4
    %v1389 = vsel %vm173, 0.0, %v1388
    %v1390 = vrot.slane %v1383, 4
    %v1391 = vsel %vm173, 0.0, %v1390
    %v1392 = vrot.slane %v1314, 4
    %v1393 = vsel %vm173, %v1392, %v1276
    %v1394 = vrot.slane %v1276, 4
    %v1395 = vsel %vm173, %v1314, %v1394
    %v1397 = vunpack.c.l.s4 1983009808
    %v1398 = vunpack.c.0.s8 %v1397
    %v1399 = vperm.slane %v1393, %v1398
    %v1401 = vunpack.c.l.s4 1983009808
    %v1402 = vunpack.c.0.s8 %v1401
    %v1403 = vperm.slane %v1395, %v1402
    %v1404 = vrot.slane %v1333, 4
    %v1405 = vsel %vm173, %v1404, %v1295
    %v1406 = vrot.slane %v1295, 4
    %v1407 = vsel %vm173, %v1333, %v1406
    %v1409 = vunpack.c.l.s4 1983009808
    %v1410 = vunpack.c.0.s8 %v1409
    %v1411 = vperm.slane %v1405, %v1410
    %v1413 = vunpack.c.l.s4 1983009808
    %v1414 = vunpack.c.0.s8 %v1413
    %v1415 = vperm.slane %v1407, %v1414
    %v1416 = vrot.slane %v1411, 4
    %v1417 = vsel %vm173, %v1416, %v1399
    %v1418 = vrot.slane %v1399, 4
    %v1419 = vsel %vm173, %v1411, %v1418
    %v1421 = vunpack.c.l.s4 1934713408
    %v1422 = vunpack.c.0.s8 %v1421
    %v1423 = vperm.slane %v1417, %v1422
    %v1425 = vunpack.c.l.s4 1934713408
    %v1426 = vunpack.c.0.s8 %v1425
    %v1427 = vperm.slane %v1419, %v1426
    %v1428 = vrot.slane %v1415, 4
    %v1429 = vsel %vm173, %v1428, %v1403
    %v1430 = vrot.slane %v1403, 4
    %v1431 = vsel %vm173, %v1415, %v1430
    %v1433 = vunpack.c.l.s4 1934713408
    %v1434 = vunpack.c.0.s8 %v1433
    %v1435 = vperm.slane %v1429, %v1434
    %v1437 = vunpack.c.l.s4 1934713408
    %v1438 = vunpack.c.0.s8 %v1437
    %v1439 = vperm.slane %v1431, %v1438
    %v1440 = vrot.slane %v1423, 4
    %v1441 = vsel %vm173, 0.0, %v1440
    %v1442 = vrot.slane %v1427, 4
    %v1443 = vsel %vm173, 0.0, %v1442
    %v1444 = vrot.slane %v1435, 4
    %v1445 = vsel %vm173, 0.0, %v1444
    %v1446 = vrot.slane %v1439, 4
    %v1447 = vsel %vm173, 0.0, %v1446
    %v1448 = vsel %vm173, %v1386, %v1367
    %v1450 = vunpack.c.l.s4 1983009808
    %v1451 = vunpack.c.0.s8 %v1450
    %v1452 = vperm.slane %v1448, %v1451
    %v1453 = vrot.slane %v1387, 4
    %v1454 = vsel %vm173, %v1453, %v1385
    %v1456 = vunpack.c.l.s4 1983009808
    %v1457 = vunpack.c.0.s8 %v1456
    %v1458 = vperm.slane %v1454, %v1457
    %v1459 = vsel %vm173, %v1390, %v1379
    %v1461 = vunpack.c.l.s4 1983009808
    %v1462 = vunpack.c.0.s8 %v1461
    %v1463 = vperm.slane %v1459, %v1462
    %v1464 = vrot.slane %v1391, 4
    %v1465 = vsel %vm173, %v1464, %v1389
    %v1467 = vunpack.c.l.s4 1983009808
    %v1468 = vunpack.c.0.s8 %v1467
    %v1469 = vperm.slane %v1465, %v1468
    %v1470 = vrot.slane %v1458, 4
    %v1471 = vsel %vm173, %v1470, %v1452
    %v1472 = vrot.slane %v1452, 4
    %v1473 = vsel %vm173, %v1458, %v1472
    %v1475 = vunpack.c.l.s4 1934713408
    %v1476 = vunpack.c.0.s8 %v1475
    %v1477 = vperm.slane %v1471, %v1476
    %v1479 = vunpack.c.l.s4 1934713408
    %v1480 = vunpack.c.0.s8 %v1479
    %v1481 = vperm.slane %v1473, %v1480
    %v1482 = vrot.slane %v1469, 4
    %v1483 = vsel %vm173, %v1482, %v1463
    %v1484 = vrot.slane %v1463, 4
    %v1485 = vsel %vm173, %v1469, %v1484
    %v1487 = vunpack.c.l.s4 1934713408
    %v1488 = vunpack.c.0.s8 %v1487
    %v1489 = vperm.slane %v1483, %v1488
    %v1491 = vunpack.c.l.s4 1934713408
    %v1492 = vunpack.c.0.s8 %v1491
    %v1493 = vperm.slane %v1485, %v1492
    %v1494 = vrot.slane %v1489, 4
    %v1495 = vsel %vm173, %v1494, %v1477
    %v1496 = vrot.slane %v1477, 4
    %v1497 = vsel %vm173, %v1489, %v1496
    %v1498 = vrot.slane %v1493, 4
    %v1499 = vsel %vm173, %v1498, %v1481
    %v1500 = vrot.slane %v1481, 4
    %v1501 = vsel %vm173, %v1493, %v1500
    %v1502 = vsel %vm173, %v1442, %v1423
    %v1504 = vunpack.c.l.s4 1983009808
    %v1505 = vunpack.c.0.s8 %v1504
    %v1506 = vperm.slane %v1502, %v1505
    %v1507 = vrot.slane %v1443, 4
    %v1508 = vsel %vm173, %v1507, %v1441
    %v1510 = vunpack.c.l.s4 1983009808
    %v1511 = vunpack.c.0.s8 %v1510
    %v1512 = vperm.slane %v1508, %v1511
    %v1513 = vsel %vm173, %v1446, %v1435
    %v1515 = vunpack.c.l.s4 1983009808
    %v1516 = vunpack.c.0.s8 %v1515
    %v1517 = vperm.slane %v1513, %v1516
    %v1518 = vrot.slane %v1447, 4
    %v1519 = vsel %vm173, %v1518, %v1445
    %v1521 = vunpack.c.l.s4 1983009808
    %v1522 = vunpack.c.0.s8 %v1521
    %v1523 = vperm.slane %v1519, %v1522
    %v1524 = vrot.slane %v1512, 4
    %v1525 = vsel %vm173, %v1524, %v1506
    %v1526 = vrot.slane %v1506, 4
    %v1527 = vsel %vm173, %v1512, %v1526
    %v1529 = vunpack.c.l.s4 1934713408
    %v1530 = vunpack.c.0.s8 %v1529
    %v1531 = vperm.slane %v1525, %v1530
    %v1533 = vunpack.c.l.s4 1934713408
    %v1534 = vunpack.c.0.s8 %v1533
    %v1535 = vperm.slane %v1527, %v1534
    %v1536 = vrot.slane %v1523, 4
    %v1537 = vsel %vm173, %v1536, %v1517
    %v1538 = vrot.slane %v1517, 4
    %v1539 = vsel %vm173, %v1523, %v1538
    %v1541 = vunpack.c.l.s4 1934713408
    %v1542 = vunpack.c.0.s8 %v1541
    %v1543 = vperm.slane %v1537, %v1542
    %v1545 = vunpack.c.l.s4 1934713408
    %v1546 = vunpack.c.0.s8 %v1545
    %v1547 = vperm.slane %v1539, %v1546
    %v1548 = vrot.slane %v1543, 4
    %v1549 = vsel %vm173, %v1548, %v1531
    %v1550 = vrot.slane %v1531, 4
    %v1551 = vsel %vm173, %v1543, %v1550
    %v1552 = vrot.slane %v1547, 4
    %v1553 = vsel %vm173, %v1552, %v1535
    %v1554 = vrot.slane %v1535, 4
    %v1555 = vsel %vm173, %v1547, %v1554
    %1558 = vrot.lane.b32.xlu0 %v1497, 8
    %v1559 = vpop.permute.xlu0 %1558
    %1560 = vrot.lane.b32.xlu0 %v1551, 8
    %v1561 = vpop.permute.xlu0 %1560
    %1566 = vrot.lane.b32.xlu0 %v1499, 16
    %v1567 = vpop.permute.xlu0 %1566
    %1568 = vrot.lane.b32.xlu0 %v1553, 16
    %v1569 = vpop.permute.xlu0 %1568
    %1574 = vrot.lane.b32.xlu0 %v1501, 24
    %v1575 = vpop.permute.xlu0 %1574
    %1576 = vrot.lane.b32.xlu0 %v1555, 24
    %v1577 = vpop.permute.xlu0 %1576
    %v1580 = vsel %vm919, %v1495, %v1559
    %v1581 = vsel %vm919, %v1549, %v1561
    %vm1582 = vcmask 130048
    %v1583 = vsel %vm1582, %v1580, %v1567
    %v1584 = vsel %vm1582, %v1581, %v1569
    %vm1585 = vcmask 195584
    %v1586 = vsel %vm1585, %v1583, %v1575
    %v1587 = vsel %vm1585, %v1584, %v1577
    %v1588 = vpack.c.bf16 %v1587, %v1586
    %v1589 = vld [vmem:[%s3] sm:$0xf]
    %v1590 = vld [vmem:[%s3 + $0x4] sm:$0xf]
    %v1591 = vld [vmem:[%s3 + $0x8] sm:$0xf]
    %v1592 = vld [vmem:[%s3 + $0xc] sm:$0xf]
    %v1593 = vld [vmem:[%s4] sm:$0x1]
    %v1595 = vperm.slane %v1593, 0
    %v1601 = vunpack.c.l.b16 %v1589
    %v1602 = vunpack.c.l.b16 %v1590
    %v1603 = vunpack.c.l.b16 %v1591
    %v1604 = vunpack.c.l.b16 %v1592
    %v1605 = vpack.c.b16 %v1602, %v1601
    %v1606 = vpack.c.b16 %v1604, %v1603
    %v1610 = vsel %vm50, %v1588, 0
    %1612 = vmatpush.bf16.msra.mxu0 0
    %1613 = vmatpush.bf16.msra.mxu0 0
    %1614 = vmatpush.bf16.msra.mxu0 0
    %1615 = vmatpush.bf16.msra.mxu0 0
    %1616 = vmatpush.bf16.msra.mxu0 0
    %1617 = vmatpush.bf16.msra.mxu0 0
    %1618 = vmatpush.bf16.msra.mxu0 %v1606
    %1619 = vmatpush.bf16.msra.mxu0 %v1605
    %1620 = vmatmul.bf16.gmra.mxu0 %v1610
    %v1621 = vpop.f32.mrf.mxu0
    %v1622 = vadd.f32 %v1595, %v1621
    %v1623 = vpop.f32.mrf.mxu0
    %v1624 = vadd.f32 %v1595, %v1623
    %1625 = vdwg.mxu0
    %v1626 = vadd.f32 %v46, %v1622
    %v1627 = vadd.f32 %v47, %v1624
    %v1628 = vld [vmem:[%s11] sm:$0x1]
    %v1629 = vld [vmem:[%s12] sm:$0x1]
    %v1630 = vsel %vm50, %v1626, 0.0
    %1631 = vadd.xlane.f32.xlu0 %v1630
    %v1632 = vpop.xlane.xlu0 %1631
    %v1633 = vsel %vm50, %v1627, 0.0
    %1634 = vadd.xlane.f32.xlu0 %v1633
    %v1635 = vpop.xlane.xlu0 %1634
    %v1636 = vmul.f32 %v1632, %v63
    %v1637 = vmul.f32 %v1635, %v63
    %v1638 = vsub.f32 %v1626, %v1636
    %v1639 = vsub.f32 %v1627, %v1637
    %v1640 = vmul.f32 %v1638, %v1638
    %v1641 = vmul.f32 %v1639, %v1639
    %v1642 = vsel %vm50, %v1640, 0.0
    %1643 = vadd.xlane.f32.xlu0 %v1642
    %v1644 = vpop.xlane.xlu0 %1643
    %v1645 = vsel %vm50, %v1641, 0.0
    %1646 = vadd.xlane.f32.xlu0 %v1645
    %v1647 = vpop.xlane.xlu0 %1646
    %v1648 = vmul.f32 %v1644, %v63
    %v1649 = vmul.f32 %v1647, %v63
    %v1650 = vadd.f32 %v1648, 1e-05
    %v1651 = vadd.f32 %v1649, 1e-05
    %v1652 = vrsqrt.pop %v1650
    %v1653 = vmul.f32 %v1652, %v1650
    %v1654 = vmul.f32 %v1653, %v1652
    %v1655 = vmul.f32 0.5, %v1654
    %v1656 = vsub.f32 1.5, %v1655
    %v1657 = vmul.f32 %v1652, %v1656
    %vm1658 = vweird.f32 %v1650
    %vm1659 = vweird.f32 %v1652
    %vm1660 = vmor %vm1658, %vm1659
    %v1661 = vsel %vm1660, %v1652, %v1657
    %v1662 = vrsqrt.pop %v1651
    %v1663 = vmul.f32 %v1662, %v1651
    %v1664 = vmul.f32 %v1663, %v1662
    %v1665 = vmul.f32 0.5, %v1664
    %v1666 = vsub.f32 1.5, %v1665
    %v1667 = vmul.f32 %v1662, %v1666
    %vm1668 = vweird.f32 %v1651
    %vm1669 = vweird.f32 %v1662
    %vm1670 = vmor %vm1668, %vm1669
    %v1671 = vsel %vm1670, %v1662, %v1667
    %v1672 = vmul.f32 %v1638, %v1661
    %v1673 = vmul.f32 %v1639, %v1671
    %v1675 = vperm.slane %v1628, 0
    %v1677 = vmul.f32 %v1675, %v1672
    %v1678 = vmul.f32 %v1675, %v1673
    %v1680 = vperm.slane %v1629, 0
    %v1682 = vadd.f32 %v1677, %v1680
    %v1683 = vadd.f32 %v1678, %v1680
    %v1684 = vpack.c.bf16 %v1683, %v1682
    %v1685 = vld [vmem:[%s5] sm:$0xf]
    %v1686 = vld [vmem:[%s5 + $0x4] sm:$0xf]
    %v1687 = vld [vmem:[%s5 + $0x8] sm:$0xf]
    %v1688 = vld [vmem:[%s5 + $0xc] sm:$0xf]
    %v1689 = vld [vmem:[%s6] sm:$0x1]
    %v1691 = vperm.slane %v1689, 0
    %v1697 = vunpack.c.l.b16 %v1685
    %v1698 = vunpack.c.l.b16 %v1686
    %v1699 = vunpack.c.l.b16 %v1687
    %v1700 = vunpack.c.l.b16 %v1688
    %v1701 = vpack.c.b16 %v1698, %v1697
    %v1702 = vpack.c.b16 %v1700, %v1699
    %v1706 = vsel %vm50, %v1684, 0
    %1708 = vmatpush.bf16.msra.mxu0 0
    %1709 = vmatpush.bf16.msra.mxu0 0
    %1710 = vmatpush.bf16.msra.mxu0 0
    %1711 = vmatpush.bf16.msra.mxu0 0
    %1712 = vmatpush.bf16.msra.mxu0 0
    %1713 = vmatpush.bf16.msra.mxu0 0
    %1714 = vmatpush.bf16.msra.mxu0 %v1702
    %1715 = vmatpush.bf16.msra.mxu0 %v1701
    %1716 = vmatmul.bf16.gmra.mxu0 %v1706
    %v1717 = vpop.f32.mrf.mxu0
    %v1718 = vadd.f32 %v1691, %v1717
    %v1719 = vpop.f32.mrf.mxu0
    %v1720 = vadd.f32 %v1691, %v1719
    %1721 = vdwg.mxu0
    %v1722 = vmul.f32 %v1718, 0.5
    %v1723 = vmul.f32 %v1720, 0.5
    %v1724 = vmul.f32 %v1718, 0.044715
    %v1725 = vmul.f32 %v1720, 0.044715
    %v1726 = vmul.f32 %v1724, %v1718
    %v1727 = vmul.f32 %v1725, %v1720
    %v1728 = vmul.f32 %v1726, %v1718
    %v1729 = vmul.f32 %v1727, %v1720
    %v1730 = vadd.f32 %v1718, %v1728
    %v1731 = vadd.f32 %v1720, %v1729
    %v1732 = vmul.f32 %v1730, 0.7978846
    %v1733 = vmul.f32 %v1731, 0.7978846
    %v1734 = vtanh.pop %v1732
    %v1735 = vtanh.pop %v1733
    %v1736 = vadd.f32 %v1734, 1.0
    %v1737 = vadd.f32 %v1735, 1.0
    %v1738 = vmul.f32 %v1722, %v1736
    %v1739 = vmul.f32 %v1723, %v1737
    %v1740 = vpack.c.bf16 %v1739, %v1738
    %v1741 = vld [vmem:[%s7] sm:$0xf]
    %v1742 = vld [vmem:[%s7 + $0x4] sm:$0xf]
    %v1743 = vld [vmem:[%s7 + $0x8] sm:$0xf]
    %v1744 = vld [vmem:[%s7 + $0xc] sm:$0xf]
    %v1745 = vld [vmem:[%s7 + $0x10] sm:$0xf]
    %v1746 = vld [vmem:[%s7 + $0x14] sm:$0xf]
    %v1747 = vld [vmem:[%s7 + $0x18] sm:$0xf]
    %v1748 = vld [vmem:[%s7 + $0x1c] sm:$0xf]
    %v1749 = vld [vmem:[%s7 + $0x20] sm:$0xf]
    %v1750 = vld [vmem:[%s7 + $0x24] sm:$0xf]
    %v1751 = vld [vmem:[%s7 + $0x28] sm:$0xf]
    %v1752 = vld [vmem:[%s7 + $0x2c] sm:$0xf]
    %v1753 = vld [vmem:[%s7 + $0x30] sm:$0xf]
    %v1754 = vld [vmem:[%s7 + $0x34] sm:$0xf]
    %v1755 = vld [vmem:[%s7 + $0x38] sm:$0xf]
    %v1756 = vld [vmem:[%s7 + $0x3c] sm:$0xf]
    %v1757 = vld [vmem:[%s8] sm:$0x1]
    %v1759 = vperm.slane %v1757, 0
    %v1777 = vunpack.c.l.b16 %v1741
    %v1778 = vunpack.c.l.b16 %v1742
    %v1779 = vunpack.c.l.b16 %v1743
    %v1780 = vunpack.c.l.b16 %v1744
    %v1781 = vunpack.c.l.b16 %v1745
    %v1782 = vunpack.c.l.b16 %v1746
    %v1783 = vunpack.c.l.b16 %v1747
    %v1784 = vunpack.c.l.b16 %v1748
    %v1785 = vunpack.c.l.b16 %v1749
    %v1786 = vunpack.c.l.b16 %v1750
    %v1787 = vunpack.c.l.b16 %v1751
    %v1788 = vunpack.c.l.b16 %v1752
    %v1789 = vunpack.c.l.b16 %v1753
    %v1790 = vunpack.c.l.b16 %v1754
    %v1791 = vunpack.c.l.b16 %v1755
    %v1792 = vunpack.c.l.b16 %v1756
    %v1793 = vpack.c.b16 %v1778, %v1777
    %v1794 = vpack.c.b16 %v1780, %v1779
    %v1795 = vpack.c.b16 %v1782, %v1781
    %v1796 = vpack.c.b16 %v1784, %v1783
    %v1797 = vpack.c.b16 %v1786, %v1785
    %v1798 = vpack.c.b16 %v1788, %v1787
    %v1799 = vpack.c.b16 %v1790, %v1789
    %v1800 = vpack.c.b16 %v1792, %v1791
    %1809 = vmatpush.bf16.msra.mxu0 %v1800
    %1810 = vmatpush.bf16.msra.mxu0 %v1799
    %1811 = vmatpush.bf16.msra.mxu0 %v1798
    %1812 = vmatpush.bf16.msra.mxu0 %v1797
    %1813 = vmatpush.bf16.msra.mxu0 %v1796
    %1814 = vmatpush.bf16.msra.mxu0 %v1795
    %1815 = vmatpush.bf16.msra.mxu0 %v1794
    %1816 = vmatpush.bf16.msra.mxu0 %v1793
    %1817 = vmatmul.bf16.gmra.mxu0 %v1740
    %v1818 = vpop.f32.mrf.mxu0
    %v1819 = vadd.f32 %v1759, %v1818
    %v1820 = vpop.f32.mrf.mxu0
    %v1821 = vadd.f32 %v1759, %v1820
    %1822 = vdwg.mxu0
    %v1823 = vadd.f32 %v1626, %v1819
    %v1824 = vadd.f32 %v1627, %v1821
    %1825 = vst.msk [vmem:[#allocation2] sm:$0xff] %vm50, %v1823
    %1826 = vst.msk [vmem:[#allocation2 + $0x8] sm:$0xff] %vm50, %v1824
    // Predicated region
    $region54: #{tpu_custom_call.1} parent=1 // pred_check
      _
    $region55: #{tpu_custom_call.1} parent=1 // pred_check_branch
      %1828 = sbr.rel (0) target = $region57
    $region56: #{tpu_custom_call.1} parent=1 // pred_region
      %1830 = vsyncadd [#allocation3], 0
      %s1831 = sshll.u32 [#allocation2], 4
      %s1832 = int_to_ptr.vmem [resolvable:$true] %s1831
      %s1833 = sshll.u32 %s13, 4
      %s1834 = int_to_ptr.hbm [resolvable:$true] %s1833
      %1839 = dma.vmem_to_hbm [thread:$0]  %s1832, 256, %s1834, [#allocation3], 128, 128, 8
    $region57: #{tpu_custom_call.1} parent=1 // pred_fallthru
      _
    // Predicated region
    $region58: #{tpu_custom_call.1} parent=1 // pred_check
      _
    $region59: #{tpu_custom_call.1} parent=1 // pred_check_branch
      %1841 = sbr.rel (0) target = $region61
    $region60: #{tpu_custom_call.1} parent=1 // pred_region
      %1843 = dma.done [#allocation3], 256
    $region61: #{tpu_custom_call.1} parent=1 // pred_fallthru
      _
    %1844 = vsyncpa [#allocation3], 1

</llo_original>
